<compile_context>
chip_gen: v7x
topology: tpu7x:2x2x1
jax: 0.10.0
libtpu: 0.0.40
codegen_flags: <defaults>
</compile_context>

<pallas_src>
import math

import jax
import jax.numpy as jnp
from jax.experimental import pallas as pl
from jax.experimental.pallas import tpu as pltpu


def _round_up(x: int, m: int) -> int:
    return (x + m - 1) // m * m


def _sigmoid(x):
    return 1.0 / (1.0 + jnp.exp(-x))


def _elu(x):
    # ELU(alpha=1): x if x > 0 else exp(x) - 1  (clamp arg so the unselected
    # branch never overflows).
    return jnp.where(x > 0, x, jnp.exp(jnp.minimum(x, 0.0)) - 1.0)


def s2seq_kernel(x_ref, wih_ref, whh_ref, bg_ref,
                 w1_ref, b1_ref, w2_ref, b2_ref,
                 o_ref, h_ref, c_ref):
    t = pl.program_id(0)
    H = h_ref.shape[-1]

    @pl.when(t == 0)
    def _init():
        h_ref[...] = jnp.zeros_like(h_ref)
        c_ref[...] = jnp.zeros_like(c_ref)
        o_ref[...] = jnp.zeros_like(o_ref)

    # ---- LSTM cell for timestep t ------------------------------------------
    x_t = x_ref[0]                                             # (bs_pad, 512)
    gates = (jnp.dot(x_t, wih_ref[...], preferred_element_type=jnp.float32)
             + jnp.dot(h_ref[...], whh_ref[...], preferred_element_type=jnp.float32)
             + bg_ref[...])                                    # (bs_pad, 4H)

    i_g = _sigmoid(gates[:, 0 * H:1 * H])
    f_g = _sigmoid(gates[:, 1 * H:2 * H])
    g_g = jnp.tanh(gates[:, 2 * H:3 * H])
    o_g = _sigmoid(gates[:, 3 * H:4 * H])

    c_new = f_g * c_ref[...] + i_g * g_g
    h_new = o_g * jnp.tanh(c_new)
    c_ref[...] = c_new
    h_ref[...] = h_new

    # ---- Head (Linear -> ELU -> Linear -> ELU) on the last timestep ---------
    @pl.when(t == pl.num_programs(0) - 1)
    def _head():
        z1 = jnp.dot(h_new, w1_ref[...], preferred_element_type=jnp.float32) + b1_ref[...]
        z1 = _elu(z1)
        z2 = jnp.dot(z1, w2_ref[...], preferred_element_type=jnp.float32) + b2_ref[...]
        z2 = _elu(z2)
        o_ref[...] = z2.astype(o_ref.dtype)


def prepare_s2seq_params(w_ih, w_hh, b_ih, b_hh, w1, b1, w2, b2):
    """One-time parameter prep (hoisted out of the forward path).

    PyTorch layouts in:
      w_ih: [4H, 512], w_hh: [4H, H], b_ih/b_hh: [4H]   (gate order i, f, g, o)
      w1:   [n_head, H], b1: [n_head], w2: [n_head, n_head], b2: [n_head]
    Returns transposed, bias-fused, lane-padded f32 arrays for the kernel.
    """
    H = w_hh.shape[1]
    n_head = w1.shape[0]
    n_head_p = _round_up(n_head, 128)

    wih_t = jnp.asarray(w_ih, jnp.float32).T                       # [512, 4H]
    whh_t = jnp.asarray(w_hh, jnp.float32).T                       # [H,   4H]
    b_g = (jnp.asarray(b_ih, jnp.float32)
           + jnp.asarray(b_hh, jnp.float32)).reshape(1, 4 * H)     # [1,   4H]

    w1_t = jnp.zeros((H, n_head_p), jnp.float32)
    w1_t = w1_t.at[:, :n_head].set(jnp.asarray(w1, jnp.float32).T)
    b1_p = jnp.zeros((1, n_head_p), jnp.float32).at[0, :n_head].set(
        jnp.asarray(b1, jnp.float32))
    w2_t = jnp.zeros((n_head_p, n_head_p), jnp.float32)
    w2_t = w2_t.at[:n_head, :n_head].set(jnp.asarray(w2, jnp.float32).T)
    b2_p = jnp.zeros((1, n_head_p), jnp.float32).at[0, :n_head].set(
        jnp.asarray(b2, jnp.float32))

    return {
        "wih_t": wih_t, "whh_t": whh_t, "b_g": b_g,
        "w1_t": w1_t, "b1": b1_p, "w2_t": w2_t, "b2": b2_p,
        "hidden_size": H, "n_head": n_head, "n_head_p": n_head_p,
    }


def s2seq_forward(x, params):
    """x: [bs, seq, 512] -> [bs, n_head]."""
    bs, seq, n_in = x.shape
    H = params["hidden_size"]
    n_head = params["n_head"]
    n_head_p = params["n_head_p"]
    bs_p = _round_up(bs, 8)                       # fill the f32 sublane granule

    # Time-major, batch padded to 8 rows (the only per-call data reshaping).
    x_t = jnp.swapaxes(jnp.asarray(x, jnp.float32), 0, 1)          # [seq, bs, 512]
    if bs_p != bs:
        x_t = jnp.pad(x_t, ((0, 0), (0, bs_p - bs), (0, 0)))

    const2d = lambda t: (0, 0)

    out = pl.pallas_call(
        s2seq_kernel,
        out_shape=jax.ShapeDtypeStruct((bs_p, n_head_p), jnp.float32),
        grid_spec=pltpu.PrefetchScalarGridSpec(
            num_scalar_prefetch=0,
            grid=(seq,),
            in_specs=[
                pl.BlockSpec((1, bs_p, n_in), lambda t: (t, 0, 0)),  # streamed x_t
                pl.BlockSpec((n_in, 4 * H), const2d),                # resident weights
                pl.BlockSpec((H, 4 * H), const2d),
                pl.BlockSpec((1, 4 * H), const2d),
                pl.BlockSpec((H, n_head_p), const2d),
                pl.BlockSpec((1, n_head_p), const2d),
                pl.BlockSpec((n_head_p, n_head_p), const2d),
                pl.BlockSpec((1, n_head_p), const2d),
            ],
            out_specs=pl.BlockSpec((bs_p, n_head_p), const2d),
            scratch_shapes=[
                pltpu.VMEM((bs_p, H), jnp.float32),   # h carry
                pltpu.VMEM((bs_p, H), jnp.float32),   # c carry
            ],
        ),
        compiler_params=pltpu.CompilerParams(
            dimension_semantics=("arbitrary",),       # time axis is a recurrence
        ),
    )(x_t, params["wih_t"], params["whh_t"], params["b_g"],
      params["w1_t"], params["b1"], params["w2_t"], params["b2"])

    return out[:bs, :n_head]


# ----------------------------- pure-JAX reference -----------------------------
def s2seq_reference(x, w_ih, w_hh, b_ih, b_hh, w1, b1, w2, b2):
    bs, seq, _ = x.shape
    H = w_hh.shape[1]
    h = jnp.zeros((bs, H), jnp.float32)
    c = jnp.zeros((bs, H), jnp.float32)
    for t in range(seq):
        g = x[:, t, :] @ w_ih.T + b_ih + h @ w_hh.T + b_hh
        i_g = _sigmoid(g[:, 0 * H:1 * H])
        f_g = _sigmoid(g[:, 1 * H:2 * H])
        g_g = jnp.tanh(g[:, 2 * H:3 * H])
        o_g = _sigmoid(g[:, 3 * H:4 * H])
        c = f_g * c + i_g * g_g
        h = o_g * jnp.tanh(c)
    z1 = _elu(h @ w1.T + b1)
    z2 = _elu(z1 @ w2.T + b2)
    return z2


if __name__ == "__main__":
    # Config consistent with the module: input_size is fixed at 512;
    # hidden_size=128, n_layers=1, bi=False, n_head=128 (lane-dense by choice).
    bs, seq, n_in = 2, 8, 512
    hidden_size, n_head = 128, 128

    key = jax.random.PRNGKey(0)
    k_x, k_wi, k_wh, k_bi, k_bh, k_w1, k_b1, k_w2, k_b2 = jax.random.split(key, 9)

    x = 0.5 * jax.random.normal(k_x, (bs, seq, n_in), jnp.float32)

    # PyTorch-style inits: LSTM uses U(-1/sqrt(H), 1/sqrt(H)) for everything,
    # nn.Linear uses U(-1/sqrt(fan_in), 1/sqrt(fan_in)).
    bl = 1.0 / math.sqrt(hidden_size)
    w_ih = jax.random.uniform(k_wi, (4 * hidden_size, n_in), jnp.float32, -bl, bl)
    w_hh = jax.random.uniform(k_wh, (4 * hidden_size, hidden_size), jnp.float32, -bl, bl)
    b_ih = jax.random.uniform(k_bi, (4 * hidden_size,), jnp.float32, -bl, bl)
    b_hh = jax.random.uniform(k_bh, (4 * hidden_size,), jnp.float32, -bl, bl)

    b1w = 1.0 / math.sqrt(hidden_size)
    w1 = jax.random.uniform(k_w1, (n_head, hidden_size), jnp.float32, -b1w, b1w)
    b1 = jax.random.uniform(k_b1, (n_head,), jnp.float32, -b1w, b1w)
    b2w = 1.0 / math.sqrt(n_head)
    w2 = jax.random.uniform(k_w2, (n_head, n_head), jnp.float32, -b2w, b2w)
    b2 = jax.random.uniform(k_b2, (n_head,), jnp.float32, -b2w, b2w)

    params = prepare_s2seq_params(w_ih, w_hh, b_ih, b_hh, w1, b1, w2, b2)

    out = s2seq_forward(x, params)
    out = jax.block_until_ready(out)

    ref = s2seq_reference(x, w_ih, w_hh, b_ih, b_hh, w1, b1, w2, b2)

    assert out.shape == (bs, n_head), out.shape
    assert jnp.allclose(out, ref, atol=1e-4, rtol=1e-4), (
        "mismatch vs JAX reference: max abs diff = %e"
        % float(jnp.max(jnp.abs(out - ref))))

    print("KERNEL_OK")
</pallas_src>

<mosaic_0001>
module attributes {stable_mosaic.version = 11 : i64} {
  func.func @s2seq_kernel(%arg0: i32, %arg1: memref<1x8x512xf32, #tpu.memory_space<vmem>>, %arg2: memref<512x512xf32, #tpu.memory_space<vmem>>, %arg3: memref<128x512xf32, #tpu.memory_space<vmem>>, %arg4: memref<1x512xf32, #tpu.memory_space<vmem>>, %arg5: memref<128x128xf32, #tpu.memory_space<vmem>>, %arg6: memref<1x128xf32, #tpu.memory_space<vmem>>, %arg7: memref<128x128xf32, #tpu.memory_space<vmem>>, %arg8: memref<1x128xf32, #tpu.memory_space<vmem>>, %arg9: memref<8x128xf32, #tpu.memory_space<vmem>>, %arg10: memref<8x128xf32, #tpu.memory_space<vmem>>, %arg11: memref<8x128xf32, #tpu.memory_space<vmem>>) attributes {dimension_semantics = [#tpu.dimension_semantics<arbitrary>], iteration_bounds = array<i64: 8>, scalar_prefetch = 0 : i64, scratch_operands = 2 : i64, tpu.core_type = #tpu.core_type<tc>, window_params = [{transform_indices = @transform_0, window_bounds = array<i64: 1, 8, 512>}, {pipeline_mode = #tpu.pipeline_mode<synchronous>, transform_indices = @transform_1, window_bounds = array<i64: 512, 512>}, {pipeline_mode = #tpu.pipeline_mode<synchronous>, transform_indices = @transform_2, window_bounds = array<i64: 128, 512>}, {pipeline_mode = #tpu.pipeline_mode<synchronous>, transform_indices = @transform_3, window_bounds = array<i64: 1, 512>}, {pipeline_mode = #tpu.pipeline_mode<synchronous>, transform_indices = @transform_4, window_bounds = array<i64: 128, 128>}, {pipeline_mode = #tpu.pipeline_mode<synchronous>, transform_indices = @transform_5, window_bounds = array<i64: 1, 128>}, {pipeline_mode = #tpu.pipeline_mode<synchronous>, transform_indices = @transform_6, window_bounds = array<i64: 128, 128>}, {pipeline_mode = #tpu.pipeline_mode<synchronous>, transform_indices = @transform_7, window_bounds = array<i64: 1, 128>}, {pipeline_mode = #tpu.pipeline_mode<synchronous>, transform_indices = @transform_8, window_bounds = array<i64: 8, 128>}]} {
    %c0_i32 = arith.constant 0 : i32
    %0 = arith.cmpi eq, %arg0, %c0_i32 : i32
    %1 = arith.extui %0 : i1 to i32
    %c0_i32_0 = arith.constant 0 : i32
    %2 = arith.cmpi ne, %1, %c0_i32_0 : i32
    scf.if %2 {
      %cst_28 = arith.constant 0.000000e+00 : f32
      %51 = vector.broadcast %cst_28 : f32 to vector<8x128xf32>
      %c0_29 = arith.constant 0 : index
      %c0_30 = arith.constant 0 : index
      %52 = vector.load %arg10[%c0_29, %c0_30] : memref<8x128xf32, #tpu.memory_space<vmem>>, vector<8x128xf32>
      tpu.vector_store %arg10[%c0_29, %c0_30], %51 {strides = array<i32>} : memref<8x128xf32, #tpu.memory_space<vmem>>, vector<8x128xf32>,
      %cst_31 = arith.constant 0.000000e+00 : f32
      %53 = vector.broadcast %cst_31 : f32 to vector<8x128xf32>
      %c0_32 = arith.constant 0 : index
      %c0_33 = arith.constant 0 : index
      %54 = vector.load %arg11[%c0_32, %c0_33] : memref<8x128xf32, #tpu.memory_space<vmem>>, vector<8x128xf32>
      tpu.vector_store %arg11[%c0_32, %c0_33], %53 {strides = array<i32>} : memref<8x128xf32, #tpu.memory_space<vmem>>, vector<8x128xf32>,
      %cst_34 = arith.constant 0.000000e+00 : f32
      %55 = vector.broadcast %cst_34 : f32 to vector<8x128xf32>
      %c0_35 = arith.constant 0 : index
      %c0_36 = arith.constant 0 : index
      %56 = vector.load %arg9[%c0_35, %c0_36] : memref<8x128xf32, #tpu.memory_space<vmem>>, vector<8x128xf32>
      tpu.vector_store %arg9[%c0_35, %c0_36], %55 {strides = array<i32>} : memref<8x128xf32, #tpu.memory_space<vmem>>, vector<8x128xf32>,
    } else {
    }
    %c0 = arith.constant 0 : index
    %c0_1 = arith.constant 0 : index
    %c0_2 = arith.constant 0 : index
    %3 = vector.load %arg1[%c0, %c0_1, %c0_2] : memref<1x8x512xf32, #tpu.memory_space<vmem>>, vector<1x8x512xf32>
    %4 = vector.shape_cast %3 : vector<1x8x512xf32> to vector<8x512xf32>
    %c0_3 = arith.constant 0 : index
    %c0_4 = arith.constant 0 : index
    %5 = vector.load %arg2[%c0_3, %c0_4] : memref<512x512xf32, #tpu.memory_space<vmem>>, vector<512x512xf32>
    %cst = arith.constant dense<0.000000e+00> : vector<8x512xf32>
    %6 = tpu.matmul %4, %5, %cst {dimension_numbers = #tpu.dot_dimension_numbers<[1], [0], [0], [1], [0, 0, 1, 1], [], []>} : vector<8x512xf32>, vector<512x512xf32>, vector<8x512xf32> -> vector<8x512xf32>
    %c0_5 = arith.constant 0 : index
    %c0_6 = arith.constant 0 : index
    %7 = vector.load %arg10[%c0_5, %c0_6] : memref<8x128xf32, #tpu.memory_space<vmem>>, vector<8x128xf32>
    %c0_7 = arith.constant 0 : index
    %c0_8 = arith.constant 0 : index
    %8 = vector.load %arg3[%c0_7, %c0_8] : memref<128x512xf32, #tpu.memory_space<vmem>>, vector<128x512xf32>
    %cst_9 = arith.constant dense<0.000000e+00> : vector<8x512xf32>
    %9 = tpu.matmul %7, %8, %cst_9 {dimension_numbers = #tpu.dot_dimension_numbers<[1], [0], [0], [1], [0, 0, 1, 1], [], []>} : vector<8x128xf32>, vector<128x512xf32>, vector<8x512xf32> -> vector<8x512xf32>
    %10 = arith.addf %6, %9 : vector<8x512xf32>
    %c0_10 = arith.constant 0 : index
    %c0_11 = arith.constant 0 : index
    %11 = vector.load %arg4[%c0_10, %c0_11] : memref<1x512xf32, #tpu.memory_space<vmem>>, vector<1x512xf32>
    %12 = vector.broadcast %11 : vector<1x512xf32> to vector<8x512xf32>
    %13 = arith.addf %10, %12 : vector<8x512xf32>
    %14 = vector.extract_strided_slice %13 {offsets = [0, 0], sizes = [8, 128], strides = [1, 1]} : vector<8x512xf32> to vector<8x128xf32>
    %cst_12 = arith.constant 0.000000e+00 : f32
    %15 = vector.broadcast %cst_12 : f32 to vector<8x128xf32>
    %16 = arith.subf %15, %14 : vector<8x128xf32>
    %17 = math.exp %16 : vector<8x128xf32>
    %cst_13 = arith.constant 1.000000e+00 : f32
    %18 = vector.broadcast %cst_13 : f32 to vector<8x128xf32>
    %19 = arith.addf %18, %17 : vector<8x128xf32>
    %cst_14 = arith.constant 1.000000e+00 : f32
    %20 = vector.broadcast %cst_14 : f32 to vector<8x128xf32>
    %21 = arith.divf %20, %19 : vector<8x128xf32>
    %22 = vector.extract_strided_slice %13 {offsets = [0, 128], sizes = [8, 128], strides = [1, 1]} : vector<8x512xf32> to vector<8x128xf32>
    %cst_15 = arith.constant 0.000000e+00 : f32
    %23 = vector.broadcast %cst_15 : f32 to vector<8x128xf32>
    %24 = arith.subf %23, %22 : vector<8x128xf32>
    %25 = math.exp %24 : vector<8x128xf32>
    %cst_16 = arith.constant 1.000000e+00 : f32
    %26 = vector.broadcast %cst_16 : f32 to vector<8x128xf32>
    %27 = arith.addf %26, %25 : vector<8x128xf32>
    %cst_17 = arith.constant 1.000000e+00 : f32
    %28 = vector.broadcast %cst_17 : f32 to vector<8x128xf32>
    %29 = arith.divf %28, %27 : vector<8x128xf32>
    %30 = vector.extract_strided_slice %13 {offsets = [0, 256], sizes = [8, 128], strides = [1, 1]} : vector<8x512xf32> to vector<8x128xf32>
    %31 = math.tanh %30 : vector<8x128xf32>
    %32 = vector.extract_strided_slice %13 {offsets = [0, 384], sizes = [8, 128], strides = [1, 1]} : vector<8x512xf32> to vector<8x128xf32>
    %cst_18 = arith.constant 0.000000e+00 : f32
    %33 = vector.broadcast %cst_18 : f32 to vector<8x128xf32>
    %34 = arith.subf %33, %32 : vector<8x128xf32>
    %35 = math.exp %34 : vector<8x128xf32>
    %cst_19 = arith.constant 1.000000e+00 : f32
    %36 = vector.broadcast %cst_19 : f32 to vector<8x128xf32>
    %37 = arith.addf %36, %35 : vector<8x128xf32>
    %cst_20 = arith.constant 1.000000e+00 : f32
    %38 = vector.broadcast %cst_20 : f32 to vector<8x128xf32>
    %39 = arith.divf %38, %37 : vector<8x128xf32>
    %c0_21 = arith.constant 0 : index
    %c0_22 = arith.constant 0 : index
    %40 = vector.load %arg11[%c0_21, %c0_22] : memref<8x128xf32, #tpu.memory_space<vmem>>, vector<8x128xf32>
    %41 = arith.mulf %29, %40 : vector<8x128xf32>
    %42 = arith.mulf %21, %31 : vector<8x128xf32>
    %43 = arith.addf %41, %42 : vector<8x128xf32>
    %44 = math.tanh %43 : vector<8x128xf32>
    %45 = arith.mulf %39, %44 : vector<8x128xf32>
    %c0_23 = arith.constant 0 : index
    %c0_24 = arith.constant 0 : index
    %46 = vector.load %arg11[%c0_23, %c0_24] : memref<8x128xf32, #tpu.memory_space<vmem>>, vector<8x128xf32>
    tpu.vector_store %arg11[%c0_23, %c0_24], %43 {strides = array<i32>} : memref<8x128xf32, #tpu.memory_space<vmem>>, vector<8x128xf32>,
    %c0_25 = arith.constant 0 : index
    %c0_26 = arith.constant 0 : index
    %47 = vector.load %arg10[%c0_25, %c0_26] : memref<8x128xf32, #tpu.memory_space<vmem>>, vector<8x128xf32>
    tpu.vector_store %arg10[%c0_25, %c0_26], %45 {strides = array<i32>} : memref<8x128xf32, #tpu.memory_space<vmem>>, vector<8x128xf32>,
    %c7_i32 = arith.constant 7 : i32
    %48 = arith.cmpi eq, %arg0, %c7_i32 : i32
    %49 = arith.extui %48 : i1 to i32
    %c0_i32_27 = arith.constant 0 : i32
    %50 = arith.cmpi ne, %49, %c0_i32_27 : i32
    scf.if %50 {
      %c0_28 = arith.constant 0 : index
      %c0_29 = arith.constant 0 : index
      %51 = vector.load %arg5[%c0_28, %c0_29] : memref<128x128xf32, #tpu.memory_space<vmem>>, vector<128x128xf32>
      %cst_30 = arith.constant dense<0.000000e+00> : vector<8x128xf32>
      %52 = tpu.matmul %45, %51, %cst_30 {dimension_numbers = #tpu.dot_dimension_numbers<[1], [0], [0], [1], [0, 0, 1, 1], [], []>} : vector<8x128xf32>, vector<128x128xf32>, vector<8x128xf32> -> vector<8x128xf32>
      %c0_31 = arith.constant 0 : index
      %c0_32 = arith.constant 0 : index
      %53 = vector.load %arg6[%c0_31, %c0_32] : memref<1x128xf32, #tpu.memory_space<vmem>>, vector<1x128xf32>
      %54 = vector.broadcast %53 : vector<1x128xf32> to vector<8x128xf32>
      %55 = arith.addf %52, %54 : vector<8x128xf32>
      %cst_33 = arith.constant 0.000000e+00 : f32
      %56 = vector.broadcast %cst_33 : f32 to vector<8x128xf32>
      %57 = arith.cmpf ogt, %55, %56 : vector<8x128xf32>
      %cst_34 = arith.constant 0.000000e+00 : f32
      %58 = vector.broadcast %cst_34 : f32 to vector<8x128xf32>
      %59 = arith.minimumf %55, %58 : vector<8x128xf32>
      %60 = math.exp %59 : vector<8x128xf32>
      %cst_35 = arith.constant 1.000000e+00 : f32
      %61 = vector.broadcast %cst_35 : f32 to vector<8x128xf32>
      %62 = arith.subf %60, %61 : vector<8x128xf32>
      %63 = arith.select %57, %55, %62 : vector<8x128xi1>, vector<8x128xf32>
      %c0_36 = arith.constant 0 : index
      %c0_37 = arith.constant 0 : index
      %64 = vector.load %arg7[%c0_36, %c0_37] : memref<128x128xf32, #tpu.memory_space<vmem>>, vector<128x128xf32>
      %cst_38 = arith.constant dense<0.000000e+00> : vector<8x128xf32>
      %65 = tpu.matmul %63, %64, %cst_38 {dimension_numbers = #tpu.dot_dimension_numbers<[1], [0], [0], [1], [0, 0, 1, 1], [], []>} : vector<8x128xf32>, vector<128x128xf32>, vector<8x128xf32> -> vector<8x128xf32>
      %c0_39 = arith.constant 0 : index
      %c0_40 = arith.constant 0 : index
      %66 = vector.load %arg8[%c0_39, %c0_40] : memref<1x128xf32, #tpu.memory_space<vmem>>, vector<1x128xf32>
      %67 = vector.broadcast %66 : vector<1x128xf32> to vector<8x128xf32>
      %68 = arith.addf %65, %67 : vector<8x128xf32>
      %cst_41 = arith.constant 0.000000e+00 : f32
      %69 = vector.broadcast %cst_41 : f32 to vector<8x128xf32>
      %70 = arith.cmpf ogt, %68, %69 : vector<8x128xf32>
      %cst_42 = arith.constant 0.000000e+00 : f32
      %71 = vector.broadcast %cst_42 : f32 to vector<8x128xf32>
      %72 = arith.minimumf %68, %71 : vector<8x128xf32>
      %73 = math.exp %72 : vector<8x128xf32>
      %cst_43 = arith.constant 1.000000e+00 : f32
      %74 = vector.broadcast %cst_43 : f32 to vector<8x128xf32>
      %75 = arith.subf %73, %74 : vector<8x128xf32>
      %76 = arith.select %70, %68, %75 : vector<8x128xi1>, vector<8x128xf32>
      %c0_44 = arith.constant 0 : index
      %c0_45 = arith.constant 0 : index
      %77 = vector.load %arg9[%c0_44, %c0_45] : memref<8x128xf32, #tpu.memory_space<vmem>>, vector<8x128xf32>
      tpu.vector_store %arg9[%c0_44, %c0_45], %76 {strides = array<i32>} : memref<8x128xf32, #tpu.memory_space<vmem>>, vector<8x128xf32>,
    } else {
    }
    return
  }
  func.func @transform_0(%arg0: i32) -> (i32, i32, i32) {
    %c0_i32 = arith.constant 0 : i32
    %c0_i32_0 = arith.constant 0 : i32
    %c0_i32_1 = arith.constant 0 : i32
    return %arg0, %c0_i32, %c0_i32_0 : i32, i32, i32
  }
  func.func @transform_1(%arg0: i32) -> (i32, i32) {
    %c0_i32 = arith.constant 0 : i32
    %c0_i32_0 = arith.constant 0 : i32
    %c0_i32_1 = arith.constant 0 : i32
    return %c0_i32, %c0_i32_0 : i32, i32
  }
  func.func @transform_2(%arg0: i32) -> (i32, i32) {
    %c0_i32 = arith.constant 0 : i32
    %c0_i32_0 = arith.constant 0 : i32
    %c0_i32_1 = arith.constant 0 : i32
    return %c0_i32, %c0_i32_0 : i32, i32
  }
  func.func @transform_3(%arg0: i32) -> (i32, i32) {
    %c0_i32 = arith.constant 0 : i32
    %c0_i32_0 = arith.constant 0 : i32
    %c0_i32_1 = arith.constant 0 : i32
    return %c0_i32, %c0_i32_0 : i32, i32
  }
  func.func @transform_4(%arg0: i32) -> (i32, i32) {
    %c0_i32 = arith.constant 0 : i32
    %c0_i32_0 = arith.constant 0 : i32
    %c0_i32_1 = arith.constant 0 : i32
    return %c0_i32, %c0_i32_0 : i32, i32
  }
  func.func @transform_5(%arg0: i32) -> (i32, i32) {
    %c0_i32 = arith.constant 0 : i32
    %c0_i32_0 = arith.constant 0 : i32
    %c0_i32_1 = arith.constant 0 : i32
    return %c0_i32, %c0_i32_0 : i32, i32
  }
  func.func @transform_6(%arg0: i32) -> (i32, i32) {
    %c0_i32 = arith.constant 0 : i32
    %c0_i32_0 = arith.constant 0 : i32
    %c0_i32_1 = arith.constant 0 : i32
    return %c0_i32, %c0_i32_0 : i32, i32
  }
  func.func @transform_7(%arg0: i32) -> (i32, i32) {
    %c0_i32 = arith.constant 0 : i32
    %c0_i32_0 = arith.constant 0 : i32
    %c0_i32_1 = arith.constant 0 : i32
    return %c0_i32, %c0_i32_0 : i32, i32
  }
  func.func @transform_8(%arg0: i32) -> (i32, i32) {
    %c0_i32 = arith.constant 0 : i32
    %c0_i32_0 = arith.constant 0 : i32
    %c0_i32_1 = arith.constant 0 : i32
    return %c0_i32, %c0_i32_0 : i32, i32
  }
}

</mosaic_0001>

<llo_original>
// kernel: tpu_custom_call.1
$region0: #{tpu_custom_call.1}
  #allocation0 [shape = 'u32[]', space=smem, size = 0x4, offset = 0x4, fixed_abs, tag = 'smem constant byte address 0x4 - core index']
  #allocation1 [shape = 'u32[144,128]{1,0:T(1,128)}', space=vmem, size = 0x12000, scoped, tag = 'internal scratch']
  #allocation2 [shape = 'f32[8,128]{1,0:T(8,128)}', space=vmem, size = 0x1000, scoped, tag = 'scratch operand']
  #allocation3 [shape = 'f32[8,128]{1,0:T(8,128)}', space=vmem, size = 0x1000, scoped, tag = 'scratch operand']
  %s0 = inlined_call_operand.hbm [shape: f32[8,8,512], index: 0, kind: input, shape index: {}]
  %s1 = inlined_call_operand.hbm [shape: f32[512,512], index: 1, kind: input, shape index: {}]
  %s2 = inlined_call_operand.hbm [shape: f32[128,512], index: 2, kind: input, shape index: {}]
  %s3 = inlined_call_operand.vmem [shape: f32[1,512], index: 3, kind: input, shape index: {}]
  %s4 = inlined_call_operand.hbm [shape: f32[128,128], index: 4, kind: input, shape index: {}]
  %s5 = inlined_call_operand.vmem [shape: f32[1,128], index: 5, kind: input, shape index: {}]
  %s6 = inlined_call_operand.hbm [shape: f32[128,128], index: 6, kind: input, shape index: {}]
  %s7 = inlined_call_operand.vmem [shape: f32[1,128], index: 7, kind: input, shape index: {}]
  %s8 = inlined_call_operand.hbm [shape: f32[8,128], index: 8, kind: output, shape index: {}]
  %s9 = sld [smem:[#allocation0]]
  $region93: #{tpu_custom_call.1} parent=0
    _
  %s11 = ssub.s32 1, %s9
  %s12 = scalar_select 0, %s11, %s9
  $region1: #{tpu_custom_call.1} parent=0
    #allocation4 [shape = 'u8[32768]{0}', space=vmem, size = 0x8000, scoped, tag = 'input window, operand 0']
    #allocation5 [shape = 's32[2]{0}', space=sflag, size = 0x8, scoped, tag = 'scoped memory for tpu_custom_call.1']
    #allocation6 [shape = 's32[2]{0}', space=sflag, size = 0x8, scoped, tag = 'scoped memory for tpu_custom_call.1']
    #allocation7 [shape = 'u8[1048576]{0}', space=vmem, size = 0x100000, scoped, tag = 'input window, operand 1, single buffered']
    #allocation8 [shape = 's32[1]{0}', space=sflag, size = 0x4, scoped, tag = 'scoped memory for tpu_custom_call.1']
    #allocation9 [shape = 'u8[262144]{0}', space=vmem, size = 0x40000, scoped, tag = 'input window, operand 2, single buffered']
    #allocation10 [shape = 'u8[65536]{0}', space=vmem, size = 0x10000, scoped, tag = 'input window, operand 4, single buffered']
    #allocation11 [shape = 's32[1]{0}', space=sflag, size = 0x4, scoped, tag = 'scoped memory for tpu_custom_call.1']
    #allocation12 [shape = 'u8[65536]{0}', space=vmem, size = 0x10000, scoped, tag = 'input window, operand 6, single buffered']
    #allocation13 [shape = 'u8[4096]{0}', space=vmem, size = 0x1000, scoped, tag = 'output window, operand 0, single buffered']
    %13 = vsyncpa [#allocation5], 0
    %s14 = scalar_lea.sflag [#allocation5], 1
    %15 = vsyncpa %s14, 0
    %16 = vsyncpa [#allocation8], 0
    %17 = vsyncpa [#allocation11], 0
    %18 = vsyncpa [#allocation6], 0
    loop: start=0, step=1, limit=10
    $region2: #{tpu_custom_call.1} parent=1 // loop_pre_header
      _
    $region3: #{tpu_custom_call.1} parent=1 // loop_header
      %s20 = sphi 0, %s24
      %p21 = scmp.ge.s32.totalorder %s20, 10
      %s30 = sphi 0, %s32
      %s33 = sphi 0, %s30
      %s34 = sphi 0, %s33
      %s50 = sphi 0, %s34
      %s54 = sphi 0, %s54
      %s56 = sphi 0, %s54
      %s57 = sphi 0, %s56
      %s71 = sphi 0, %s57
      %s75 = sphi 0, %s75
      %s77 = sphi 0, %s75
      %s78 = sphi 0, %s77
      %s92 = sphi 0, %s78
      %s96 = sphi 0, %s96
      %s98 = sphi 0, %s96
      %s99 = sphi 0, %s98
      %s113 = sphi 0, %s99
      %s117 = sphi 0, %s117
      %s119 = sphi 0, %s117
      %s120 = sphi 0, %s119
      %s134 = sphi 0, %s120
      %s138 = sphi 0, %s138
      %s140 = sphi 0, %s138
      %s141 = sphi 0, %s140
      %s155 = sphi 0, %s141
      %s159 = sphi 0, %s159
      %s161 = sphi 0, %s159
      %s162 = sphi 0, %s161
      %s176 = sphi 0, %s162
      %s180 = sphi 0, %s180
      %s182 = sphi 0, %s180
      %s183 = sphi 0, %s182
      %s197 = sphi 0, %s183
      %s201 = sphi 0, %s201
      %s203 = sphi 0, %s201
      %s204 = sphi 0, %s203
      %s218 = sphi 0, %s204
    $region4: #{tpu_custom_call.1} parent=1 // loop_header_branch
      %23 = sbr.rel (%p21) target = $region8
    $region5: #{tpu_custom_call.1} parent=1 // loop_body
      %s25 = ssub.s32 %s20, 1
      %s26 = ssub.s32 %s20, 2
      %s27 = sadd.s32 %s20, 1
      %s28 = ssub.s32 %s20, %s27
      %p29 = scmp.eq.s32.totalorder %s28, 0
      %s31 = sadd.s32 %s30, 1
      %s32 = scalar_select %p29, %s30, %s31
      %p35 = pneg %p29
      %p36 = scmp.eq.s32.totalorder %s20, 7
      %p37 = por %p35, %p36
      %p38 = scmp.ne.s32.totalorder %s30, %s33
      %p39 = scmp.eq.s32.totalorder %s20, 0
      %p40 = por %p38, %p39
      %p41 = scmp.ne.s32.totalorder %s30, %s33
      %p42 = scmp.eq.s32.totalorder %s25, 7
      %p43 = por %p41, %p42
      %p44 = scmp.ne.s32.totalorder %s33, %s34
      %p45 = scmp.eq.s32.totalorder %s25, 0
      %p46 = por %p44, %p45
      %p47 = scmp.ne.s32.totalorder %s33, %s34
      %p48 = scmp.eq.s32.totalorder %s26, 7
      %p49 = por %p47, %p48
      %p51 = scmp.ne.s32.totalorder %s34, %s50
      %p52 = scmp.eq.s32.totalorder %s26, 0
      %p53 = por %p51, %p52
      %s55 = sadd.s32 %s54, 1
      %p58 = scmp.eq.s32.totalorder %s20, 7
      %p59 = scmp.ne.s32.totalorder %s54, %s56
      %p60 = scmp.eq.s32.totalorder %s20, 0
      %p61 = por %p59, %p60
      %p62 = scmp.ne.s32.totalorder %s54, %s56
      %p63 = scmp.eq.s32.totalorder %s25, 7
      %p64 = por %p62, %p63
      %p65 = scmp.ne.s32.totalorder %s56, %s57
      %p66 = scmp.eq.s32.totalorder %s25, 0
      %p67 = por %p65, %p66
      %p68 = scmp.ne.s32.totalorder %s56, %s57
      %p69 = scmp.eq.s32.totalorder %s26, 7
      %p70 = por %p68, %p69
      %p72 = scmp.ne.s32.totalorder %s57, %s71
      %p73 = scmp.eq.s32.totalorder %s26, 0
      %p74 = por %p72, %p73
      %s76 = sadd.s32 %s75, 1
      %p79 = scmp.eq.s32.totalorder %s20, 7
      %p80 = scmp.ne.s32.totalorder %s75, %s77
      %p81 = scmp.eq.s32.totalorder %s20, 0
      %p82 = por %p80, %p81
      %p83 = scmp.ne.s32.totalorder %s75, %s77
      %p84 = scmp.eq.s32.totalorder %s25, 7
      %p85 = por %p83, %p84
      %p86 = scmp.ne.s32.totalorder %s77, %s78
      %p87 = scmp.eq.s32.totalorder %s25, 0
      %p88 = por %p86, %p87
      %p89 = scmp.ne.s32.totalorder %s77, %s78
      %p90 = scmp.eq.s32.totalorder %s26, 7
      %p91 = por %p89, %p90
      %p93 = scmp.ne.s32.totalorder %s78, %s92
      %p94 = scmp.eq.s32.totalorder %s26, 0
      %p95 = por %p93, %p94
      %s97 = sadd.s32 %s96, 1
      %p100 = scmp.eq.s32.totalorder %s20, 7
      %p101 = scmp.ne.s32.totalorder %s96, %s98
      %p102 = scmp.eq.s32.totalorder %s20, 0
      %p103 = por %p101, %p102
      %p104 = scmp.ne.s32.totalorder %s96, %s98
      %p105 = scmp.eq.s32.totalorder %s25, 7
      %p106 = por %p104, %p105
      %p107 = scmp.ne.s32.totalorder %s98, %s99
      %p108 = scmp.eq.s32.totalorder %s25, 0
      %p109 = por %p107, %p108
      %p110 = scmp.ne.s32.totalorder %s98, %s99
      %p111 = scmp.eq.s32.totalorder %s26, 7
      %p112 = por %p110, %p111
      %p114 = scmp.ne.s32.totalorder %s99, %s113
      %p115 = scmp.eq.s32.totalorder %s26, 0
      %p116 = por %p114, %p115
      %s118 = sadd.s32 %s117, 1
      %p121 = scmp.eq.s32.totalorder %s20, 7
      %p122 = scmp.ne.s32.totalorder %s117, %s119
      %p123 = scmp.eq.s32.totalorder %s20, 0
      %p124 = por %p122, %p123
      %p125 = scmp.ne.s32.totalorder %s117, %s119
      %p126 = scmp.eq.s32.totalorder %s25, 7
      %p127 = por %p125, %p126
      %p128 = scmp.ne.s32.totalorder %s119, %s120
      %p129 = scmp.eq.s32.totalorder %s25, 0
      %p130 = por %p128, %p129
      %p131 = scmp.ne.s32.totalorder %s119, %s120
      %p132 = scmp.eq.s32.totalorder %s26, 7
      %p133 = por %p131, %p132
      %p135 = scmp.ne.s32.totalorder %s120, %s134
      %p136 = scmp.eq.s32.totalorder %s26, 0
      %p137 = por %p135, %p136
      %s139 = sadd.s32 %s138, 1
      %p142 = scmp.eq.s32.totalorder %s20, 7
      %p143 = scmp.ne.s32.totalorder %s138, %s140
      %p144 = scmp.eq.s32.totalorder %s20, 0
      %p145 = por %p143, %p144
      %p146 = scmp.ne.s32.totalorder %s138, %s140
      %p147 = scmp.eq.s32.totalorder %s25, 7
      %p148 = por %p146, %p147
      %p149 = scmp.ne.s32.totalorder %s140, %s141
      %p150 = scmp.eq.s32.totalorder %s25, 0
      %p151 = por %p149, %p150
      %p152 = scmp.ne.s32.totalorder %s140, %s141
      %p153 = scmp.eq.s32.totalorder %s26, 7
      %p154 = por %p152, %p153
      %p156 = scmp.ne.s32.totalorder %s141, %s155
      %p157 = scmp.eq.s32.totalorder %s26, 0
      %p158 = por %p156, %p157
      %s160 = sadd.s32 %s159, 1
      %p163 = scmp.eq.s32.totalorder %s20, 7
      %p164 = scmp.ne.s32.totalorder %s159, %s161
      %p165 = scmp.eq.s32.totalorder %s20, 0
      %p166 = por %p164, %p165
      %p167 = scmp.ne.s32.totalorder %s159, %s161
      %p168 = scmp.eq.s32.totalorder %s25, 7
      %p169 = por %p167, %p168
      %p170 = scmp.ne.s32.totalorder %s161, %s162
      %p171 = scmp.eq.s32.totalorder %s25, 0
      %p172 = por %p170, %p171
      %p173 = scmp.ne.s32.totalorder %s161, %s162
      %p174 = scmp.eq.s32.totalorder %s26, 7
      %p175 = por %p173, %p174
      %p177 = scmp.ne.s32.totalorder %s162, %s176
      %p178 = scmp.eq.s32.totalorder %s26, 0
      %p179 = por %p177, %p178
      %s181 = sadd.s32 %s180, 1
      %p184 = scmp.eq.s32.totalorder %s20, 7
      %p185 = scmp.ne.s32.totalorder %s180, %s182
      %p186 = scmp.eq.s32.totalorder %s20, 0
      %p187 = por %p185, %p186
      %p188 = scmp.ne.s32.totalorder %s180, %s182
      %p189 = scmp.eq.s32.totalorder %s25, 7
      %p190 = por %p188, %p189
      %p191 = scmp.ne.s32.totalorder %s182, %s183
      %p192 = scmp.eq.s32.totalorder %s25, 0
      %p193 = por %p191, %p192
      %p194 = scmp.ne.s32.totalorder %s182, %s183
      %p195 = scmp.eq.s32.totalorder %s26, 7
      %p196 = por %p194, %p195
      %p198 = scmp.ne.s32.totalorder %s183, %s197
      %p199 = scmp.eq.s32.totalorder %s26, 0
      %p200 = por %p198, %p199
      %s202 = sadd.s32 %s201, 1
      %p205 = scmp.eq.s32.totalorder %s20, 7
      %p206 = scmp.ne.s32.totalorder %s201, %s203
      %p207 = scmp.eq.s32.totalorder %s20, 0
      %p208 = por %p206, %p207
      %p209 = scmp.ne.s32.totalorder %s201, %s203
      %p210 = scmp.eq.s32.totalorder %s25, 7
      %p211 = por %p209, %p210
      %p212 = scmp.ne.s32.totalorder %s203, %s204
      %p213 = scmp.eq.s32.totalorder %s25, 0
      %p214 = por %p212, %p213
      %p215 = scmp.ne.s32.totalorder %s203, %s204
      %p216 = scmp.eq.s32.totalorder %s26, 7
      %p217 = por %p215, %p216
      %p219 = scmp.ne.s32.totalorder %s204, %s218
      %p220 = scmp.eq.s32.totalorder %s26, 0
      %p221 = por %p219, %p220
      %p222 = scmp.le.s32.totalorder 1, %s20
      %p223 = scmp.lt.s32.totalorder %s20, 9
      %p224 = pnand %p222, %p223
      %p225 = pneg %p224
      // Predicated region
      $region9: #{tpu_custom_call.1} parent=5 // pred_check
        _
      $region10: #{tpu_custom_call.1} parent=5 // pred_check_branch
        %227 = sbr.rel (%p224) target = $region12
      $region11: #{tpu_custom_call.1} parent=5 // pred_region
        %s228 = ssub.s32 %s20, 1
        // Predicated region
        $region13: #{tpu_custom_call.1} parent=11 // pred_check
          %p229 = pneg %p67
        $region14: #{tpu_custom_call.1} parent=11 // pred_check_branch
          %231 = sbr.rel (%p229) target = $region16
        $region15: #{tpu_custom_call.1} parent=11 // pred_region
          %s233 = ssub.s32 32768, 32768
          %234 = vsyncadd [#allocation8], %s233
          %s235 = sshll.u32 [#allocation7], 4
          %s236 = int_to_ptr.vmem [resolvable:$true] %s235
          %241 = dma.hbm_to_vmem [thread:$0]  %s1, 32768, %s236, [#allocation8], 512, 512, 32
        $region16: #{tpu_custom_call.1} parent=11 // pred_fallthru
          _
        // Predicated region
        $region17: #{tpu_custom_call.1} parent=11 // pred_check
          %p242 = pneg %p88
        $region18: #{tpu_custom_call.1} parent=11 // pred_check_branch
          %244 = sbr.rel (%p242) target = $region20
        $region19: #{tpu_custom_call.1} parent=11 // pred_region
          %s246 = ssub.s32 8192, 8192
          %247 = vsyncadd [#allocation8], %s246
          %s248 = sshll.u32 [#allocation9], 4
          %s249 = int_to_ptr.vmem [resolvable:$true] %s248
          %254 = dma.hbm_to_vmem [thread:$0]  %s2, 8192, %s249, [#allocation8], 512, 512, 32
        $region20: #{tpu_custom_call.1} parent=11 // pred_fallthru
          _
        // Predicated region
        $region21: #{tpu_custom_call.1} parent=11 // pred_check
          %p255 = pneg %p109
        $region22: #{tpu_custom_call.1} parent=11 // pred_check_branch
          %257 = sbr.rel (%p255) target = $region24
        $region23: #{tpu_custom_call.1} parent=11 // pred_region
          _
        $region24: #{tpu_custom_call.1} parent=11 // pred_fallthru
          _
        // Predicated region
        $region25: #{tpu_custom_call.1} parent=11 // pred_check
          %p258 = pneg %p130
        $region26: #{tpu_custom_call.1} parent=11 // pred_check_branch
          %260 = sbr.rel (%p258) target = $region28
        $region27: #{tpu_custom_call.1} parent=11 // pred_region
          %s262 = ssub.s32 2048, 2048
          %263 = vsyncadd [#allocation11], %s262
          %s264 = sshll.u32 [#allocation10], 4
          %s265 = int_to_ptr.vmem [resolvable:$true] %s264
          %270 = dma.hbm_to_vmem [thread:$0]  %s4, 2048, %s265, [#allocation11], 128, 128, 8
        $region28: #{tpu_custom_call.1} parent=11 // pred_fallthru
          _
        // Predicated region
        $region29: #{tpu_custom_call.1} parent=11 // pred_check
          %p271 = pneg %p151
        $region30: #{tpu_custom_call.1} parent=11 // pred_check_branch
          %273 = sbr.rel (%p271) target = $region32
        $region31: #{tpu_custom_call.1} parent=11 // pred_region
          _
        $region32: #{tpu_custom_call.1} parent=11 // pred_fallthru
          _
        // Predicated region
        $region33: #{tpu_custom_call.1} parent=11 // pred_check
          %p274 = pneg %p172
        $region34: #{tpu_custom_call.1} parent=11 // pred_check_branch
          %276 = sbr.rel (%p274) target = $region36
        $region35: #{tpu_custom_call.1} parent=11 // pred_region
          %s278 = ssub.s32 2048, 2048
          %279 = vsyncadd [#allocation11], %s278
          %s280 = sshll.u32 [#allocation12], 4
          %s281 = int_to_ptr.vmem [resolvable:$true] %s280
          %286 = dma.hbm_to_vmem [thread:$0]  %s6, 2048, %s281, [#allocation11], 128, 128, 8
        $region36: #{tpu_custom_call.1} parent=11 // pred_fallthru
          _
        // Predicated region
        $region37: #{tpu_custom_call.1} parent=11 // pred_check
          %p287 = pneg %p193
        $region38: #{tpu_custom_call.1} parent=11 // pred_check_branch
          %289 = sbr.rel (%p287) target = $region40
        $region39: #{tpu_custom_call.1} parent=11 // pred_region
          _
        $region40: #{tpu_custom_call.1} parent=11 // pred_fallthru
          _
      $region12: #{tpu_custom_call.1} parent=5 // pred_fallthru
        _
      %p290 = scmp.lt.s32.totalorder %s20, 8
      // Predicated region
      $region41: #{tpu_custom_call.1} parent=5 // pred_check
        %p291 = pneg %p290
      $region42: #{tpu_custom_call.1} parent=5 // pred_check_branch
        %293 = sbr.rel (%p291) target = $region44
      $region43: #{tpu_custom_call.1} parent=5 // pred_region
        // Predicated region
        $region45: #{tpu_custom_call.1} parent=43 // pred_check
          %p294 = pneg %p40
        $region46: #{tpu_custom_call.1} parent=43 // pred_check_branch
          %296 = sbr.rel (%p294) target = $region48
        $region47: #{tpu_custom_call.1} parent=43 // pred_region
          %s297 = sand.u32 %s30, 1
          %s298 = scalar_lea.sflag [#allocation5], %s297
          %s299 = sand.u32 %s30, 1
          %s300 = smul.addr %s299, 32
          %s301 = scalar_lea.vmem [#allocation4], %s300
          %s303 = ssub.s32 512, 512
          %304 = vsyncadd %s298, %s303
          %s305 = smul.addr %s20, 4
          %s306 = smul.addr %s305, 128
          %s307 = scalar_lea.hbm %s0, %s306
          %s309 = sshll.u32 %s301, 4
          %s310 = int_to_ptr.vmem [resolvable:$true] %s309
          %312 = dma.hbm_to_vmem [thread:$0]  %s307, 512, %s310, %s298
        $region48: #{tpu_custom_call.1} parent=43 // pred_fallthru
          _
      $region44: #{tpu_custom_call.1} parent=5 // pred_fallthru
        _
      %p313 = scmp.le.s32.totalorder 1, %s20
      %p314 = scmp.lt.s32.totalorder %s20, 9
      %p315 = pnand %p313, %p314
      %p316 = pneg %p315
      // Predicated region
      $region49: #{tpu_custom_call.1} parent=5 // pred_check
        _
      $region50: #{tpu_custom_call.1} parent=5 // pred_check_branch
        %318 = sbr.rel (%p315) target = $region52
      $region51: #{tpu_custom_call.1} parent=5 // pred_region
        %s319 = ssub.s32 %s20, 1
        %s320 = sand.u32 %s33, 1
        %s321 = scalar_lea.sflag [#allocation5], %s320
        %s322 = sand.u32 %s33, 1
        %s323 = smul.addr %s322, 32
        %s324 = scalar_lea.vmem [#allocation4], %s323
        // Predicated region
        $region53: #{tpu_custom_call.1} parent=51 // pred_check
          %p325 = pneg %p46
        $region54: #{tpu_custom_call.1} parent=51 // pred_check_branch
          %327 = sbr.rel (%p325) target = $region56
        $region55: #{tpu_custom_call.1} parent=51 // pred_region
          %328 = dma.done %s321, 512
        $region56: #{tpu_custom_call.1} parent=51 // pred_fallthru
          _
        // Predicated region
        $region57: #{tpu_custom_call.1} parent=51 // pred_check
          %p329 = pneg %p67
        $region58: #{tpu_custom_call.1} parent=51 // pred_check_branch
          %331 = sbr.rel (%p329) target = $region60
        $region59: #{tpu_custom_call.1} parent=51 // pred_region
          %332 = dma.done [#allocation8], 32768
        $region60: #{tpu_custom_call.1} parent=51 // pred_fallthru
          _
        // Predicated region
        $region61: #{tpu_custom_call.1} parent=51 // pred_check
          %p333 = pneg %p88
        $region62: #{tpu_custom_call.1} parent=51 // pred_check_branch
          %335 = sbr.rel (%p333) target = $region64
        $region63: #{tpu_custom_call.1} parent=51 // pred_region
          %336 = dma.done [#allocation8], 8192
        $region64: #{tpu_custom_call.1} parent=51 // pred_fallthru
          _
        // Predicated region
        $region65: #{tpu_custom_call.1} parent=51 // pred_check
          %p337 = pneg %p130
        $region66: #{tpu_custom_call.1} parent=51 // pred_check_branch
          %339 = sbr.rel (%p337) target = $region68
        $region67: #{tpu_custom_call.1} parent=51 // pred_region
          %340 = dma.done [#allocation11], 2048
        $region68: #{tpu_custom_call.1} parent=51 // pred_fallthru
          _
        // Predicated region
        $region69: #{tpu_custom_call.1} parent=51 // pred_check
          %p341 = pneg %p172
        $region70: #{tpu_custom_call.1} parent=51 // pred_check_branch
          %343 = sbr.rel (%p341) target = $region72
        $region71: #{tpu_custom_call.1} parent=51 // pred_region
          %344 = dma.done [#allocation11], 2048
        $region72: #{tpu_custom_call.1} parent=51 // pred_fallthru
          _
        %s345 = sand.u32 %s33, 1
        %s346 = scalar_lea.sflag [#allocation5], %s345
        %s347 = sand.u32 %s33, 1
        %s348 = smul.addr %s347, 32
        %s349 = scalar_lea.vmem [#allocation4], %s348
        %p350 = pneg %p46
        %p351 = pneg %p43
        %p352 = pneg %p67
        %p353 = pneg %p64
        %p354 = pneg %p88
        %p355 = pneg %p85
        %p356 = pneg %p109
        %p357 = pneg %p106
        %p358 = pneg %p130
        %p359 = pneg %p127
        %p360 = pneg %p151
        %p361 = pneg %p148
        %p362 = pneg %p172
        %p363 = pneg %p169
        %p364 = pneg %p193
        %p365 = pneg %p190
        %p366 = pneg %p214
        %p367 = pneg %p211
        %p368 = scmp.eq.s32.totalorder %s25, 0
        // Predicated region
        $region73: #{tpu_custom_call.1} parent=51 // pred_check
          %p369 = pneg %p368
        $region74: #{tpu_custom_call.1} parent=51 // pred_check_branch
          %371 = sbr.rel (%p369) target = $region76
        $region75: #{tpu_custom_call.1} parent=51 // pred_region
          %372 = vst [vmem:[#allocation2] sm:$0xff] 0.0
          %373 = vst [vmem:[#allocation3] sm:$0xff] 0.0
          %374 = vst [vmem:[#allocation13] sm:$0xff] 0.0
        $region76: #{tpu_custom_call.1} parent=51 // pred_fallthru
          _
        %v375 = vld [vmem:[%s324] sm:$0xff]
        %v376 = vld [vmem:[%s324 + $0x8] sm:$0xff]
        %v377 = vld [vmem:[%s324 + $0x10] sm:$0xff]
        %v378 = vld [vmem:[%s324 + $0x18] sm:$0xff]
        %v379 = vld [vmem:[#allocation7] sm:$0xff]
        %v380 = vld [vmem:[#allocation7 + $0x8] sm:$0xff]
        %v381 = vld [vmem:[#allocation7 + $0x10] sm:$0xff]
        %v382 = vld [vmem:[#allocation7 + $0x18] sm:$0xff]
        %v383 = vld [vmem:[#allocation7 + $0x20] sm:$0xff]
        %v384 = vld [vmem:[#allocation7 + $0x28] sm:$0xff]
        %v385 = vld [vmem:[#allocation7 + $0x30] sm:$0xff]
        %v386 = vld [vmem:[#allocation7 + $0x38] sm:$0xff]
        %v387 = vld [vmem:[#allocation7 + $0x40] sm:$0xff]
        %v388 = vld [vmem:[#allocation7 + $0x48] sm:$0xff]
        %v389 = vld [vmem:[#allocation7 + $0x50] sm:$0xff]
        %v390 = vld [vmem:[#allocation7 + $0x58] sm:$0xff]
        %v391 = vld [vmem:[#allocation7 + $0x60] sm:$0xff]
        %v392 = vld [vmem:[#allocation7 + $0x68] sm:$0xff]
        %v393 = vld [vmem:[#allocation7 + $0x70] sm:$0xff]
        %v394 = vld [vmem:[#allocation7 + $0x78] sm:$0xff]
        %v395 = vld [vmem:[#allocation7 + $0x80] sm:$0xff]
        %v396 = vld [vmem:[#allocation7 + $0x88] sm:$0xff]
        %v397 = vld [vmem:[#allocation7 + $0x90] sm:$0xff]
        %v398 = vld [vmem:[#allocation7 + $0x98] sm:$0xff]
        %v399 = vld [vmem:[#allocation7 + $0xa0] sm:$0xff]
        %v400 = vld [vmem:[#allocation7 + $0xa8] sm:$0xff]
        %v401 = vld [vmem:[#allocation7 + $0xb0] sm:$0xff]
        %v402 = vld [vmem:[#allocation7 + $0xb8] sm:$0xff]
        %v403 = vld [vmem:[#allocation7 + $0xc0] sm:$0xff]
        %v404 = vld [vmem:[#allocation7 + $0xc8] sm:$0xff]
        %v405 = vld [vmem:[#allocation7 + $0xd0] sm:$0xff]
        %v406 = vld [vmem:[#allocation7 + $0xd8] sm:$0xff]
        %v407 = vld [vmem:[#allocation7 + $0xe0] sm:$0xff]
        %v408 = vld [vmem:[#allocation7 + $0xe8] sm:$0xff]
        %v409 = vld [vmem:[#allocation7 + $0xf0] sm:$0xff]
        %v410 = vld [vmem:[#allocation7 + $0xf8] sm:$0xff]
        %v411 = vld [vmem:[#allocation7 + $0x100] sm:$0xff]
        %v412 = vld [vmem:[#allocation7 + $0x108] sm:$0xff]
        %v413 = vld [vmem:[#allocation7 + $0x110] sm:$0xff]
        %v414 = vld [vmem:[#allocation7 + $0x118] sm:$0xff]
        %v415 = vld [vmem:[#allocation7 + $0x120] sm:$0xff]
        %v416 = vld [vmem:[#allocation7 + $0x128] sm:$0xff]
        %v417 = vld [vmem:[#allocation7 + $0x130] sm:$0xff]
        %v418 = vld [vmem:[#allocation7 + $0x138] sm:$0xff]
        %v419 = vld [vmem:[#allocation7 + $0x140] sm:$0xff]
        %v420 = vld [vmem:[#allocation7 + $0x148] sm:$0xff]
        %v421 = vld [vmem:[#allocation7 + $0x150] sm:$0xff]
        %v422 = vld [vmem:[#allocation7 + $0x158] sm:$0xff]
        %v423 = vld [vmem:[#allocation7 + $0x160] sm:$0xff]
        %v424 = vld [vmem:[#allocation7 + $0x168] sm:$0xff]
        %v425 = vld [vmem:[#allocation7 + $0x170] sm:$0xff]
        %v426 = vld [vmem:[#allocation7 + $0x178] sm:$0xff]
        %v427 = vld [vmem:[#allocation7 + $0x180] sm:$0xff]
        %v428 = vld [vmem:[#allocation7 + $0x188] sm:$0xff]
        %v429 = vld [vmem:[#allocation7 + $0x190] sm:$0xff]
        %v430 = vld [vmem:[#allocation7 + $0x198] sm:$0xff]
        %v431 = vld [vmem:[#allocation7 + $0x1a0] sm:$0xff]
        %v432 = vld [vmem:[#allocation7 + $0x1a8] sm:$0xff]
        %v433 = vld [vmem:[#allocation7 + $0x1b0] sm:$0xff]
        %v434 = vld [vmem:[#allocation7 + $0x1b8] sm:$0xff]
        %v435 = vld [vmem:[#allocation7 + $0x1c0] sm:$0xff]
        %v436 = vld [vmem:[#allocation7 + $0x1c8] sm:$0xff]
        %v437 = vld [vmem:[#allocation7 + $0x1d0] sm:$0xff]
        %v438 = vld [vmem:[#allocation7 + $0x1d8] sm:$0xff]
        %v439 = vld [vmem:[#allocation7 + $0x1e0] sm:$0xff]
        %v440 = vld [vmem:[#allocation7 + $0x1e8] sm:$0xff]
        %v441 = vld [vmem:[#allocation7 + $0x1f0] sm:$0xff]
        %v442 = vld [vmem:[#allocation7 + $0x1f8] sm:$0xff]
        %v443 = vld [vmem:[#allocation7 + $0x200] sm:$0xff]
        %v444 = vld [vmem:[#allocation7 + $0x208] sm:$0xff]
        %v445 = vld [vmem:[#allocation7 + $0x210] sm:$0xff]
        %v446 = vld [vmem:[#allocation7 + $0x218] sm:$0xff]
        %v447 = vld [vmem:[#allocation7 + $0x220] sm:$0xff]
        %v448 = vld [vmem:[#allocation7 + $0x228] sm:$0xff]
        %v449 = vld [vmem:[#allocation7 + $0x230] sm:$0xff]
        %v450 = vld [vmem:[#allocation7 + $0x238] sm:$0xff]
        %v451 = vld [vmem:[#allocation7 + $0x240] sm:$0xff]
        %v452 = vld [vmem:[#allocation7 + $0x248] sm:$0xff]
        %v453 = vld [vmem:[#allocation7 + $0x250] sm:$0xff]
        %v454 = vld [vmem:[#allocation7 + $0x258] sm:$0xff]
        %v455 = vld [vmem:[#allocation7 + $0x260] sm:$0xff]
        %v456 = vld [vmem:[#allocation7 + $0x268] sm:$0xff]
        %v457 = vld [vmem:[#allocation7 + $0x270] sm:$0xff]
        %v458 = vld [vmem:[#allocation7 + $0x278] sm:$0xff]
        %v459 = vld [vmem:[#allocation7 + $0x280] sm:$0xff]
        %v460 = vld [vmem:[#allocation7 + $0x288] sm:$0xff]
        %v461 = vld [vmem:[#allocation7 + $0x290] sm:$0xff]
        %v462 = vld [vmem:[#allocation7 + $0x298] sm:$0xff]
        %v463 = vld [vmem:[#allocation7 + $0x2a0] sm:$0xff]
        %v464 = vld [vmem:[#allocation7 + $0x2a8] sm:$0xff]
        %v465 = vld [vmem:[#allocation7 + $0x2b0] sm:$0xff]
        %v466 = vld [vmem:[#allocation7 + $0x2b8] sm:$0xff]
        %v467 = vld [vmem:[#allocation7 + $0x2c0] sm:$0xff]
        %v468 = vld [vmem:[#allocation7 + $0x2c8] sm:$0xff]
        %v469 = vld [vmem:[#allocation7 + $0x2d0] sm:$0xff]
        %v470 = vld [vmem:[#allocation7 + $0x2d8] sm:$0xff]
        %v471 = vld [vmem:[#allocation7 + $0x2e0] sm:$0xff]
        %v472 = vld [vmem:[#allocation7 + $0x2e8] sm:$0xff]
        %v473 = vld [vmem:[#allocation7 + $0x2f0] sm:$0xff]
        %v474 = vld [vmem:[#allocation7 + $0x2f8] sm:$0xff]
        %v475 = vld [vmem:[#allocation7 + $0x300] sm:$0xff]
        %v476 = vld [vmem:[#allocation7 + $0x308] sm:$0xff]
        %v477 = vld [vmem:[#allocation7 + $0x310] sm:$0xff]
        %v478 = vld [vmem:[#allocation7 + $0x318] sm:$0xff]
        %v479 = vld [vmem:[#allocation7 + $0x320] sm:$0xff]
        %v480 = vld [vmem:[#allocation7 + $0x328] sm:$0xff]
        %v481 = vld [vmem:[#allocation7 + $0x330] sm:$0xff]
        %v482 = vld [vmem:[#allocation7 + $0x338] sm:$0xff]
        %v483 = vld [vmem:[#allocation7 + $0x340] sm:$0xff]
        %v484 = vld [vmem:[#allocation7 + $0x348] sm:$0xff]
        %v485 = vld [vmem:[#allocation7 + $0x350] sm:$0xff]
        %v486 = vld [vmem:[#allocation7 + $0x358] sm:$0xff]
        %v487 = vld [vmem:[#allocation7 + $0x360] sm:$0xff]
        %v488 = vld [vmem:[#allocation7 + $0x368] sm:$0xff]
        %v489 = vld [vmem:[#allocation7 + $0x370] sm:$0xff]
        %v490 = vld [vmem:[#allocation7 + $0x378] sm:$0xff]
        %v491 = vld [vmem:[#allocation7 + $0x380] sm:$0xff]
        %v492 = vld [vmem:[#allocation7 + $0x388] sm:$0xff]
        %v493 = vld [vmem:[#allocation7 + $0x390] sm:$0xff]
        %v494 = vld [vmem:[#allocation7 + $0x398] sm:$0xff]
        %v495 = vld [vmem:[#allocation7 + $0x3a0] sm:$0xff]
        %v496 = vld [vmem:[#allocation7 + $0x3a8] sm:$0xff]
        %v497 = vld [vmem:[#allocation7 + $0x3b0] sm:$0xff]
        %v498 = vld [vmem:[#allocation7 + $0x3b8] sm:$0xff]
        %v499 = vld [vmem:[#allocation7 + $0x3c0] sm:$0xff]
        %v500 = vld [vmem:[#allocation7 + $0x3c8] sm:$0xff]
        %v501 = vld [vmem:[#allocation7 + $0x3d0] sm:$0xff]
        %v502 = vld [vmem:[#allocation7 + $0x3d8] sm:$0xff]
        %v503 = vld [vmem:[#allocation7 + $0x3e0] sm:$0xff]
        %v504 = vld [vmem:[#allocation7 + $0x3e8] sm:$0xff]
        %v505 = vld [vmem:[#allocation7 + $0x3f0] sm:$0xff]
        %v506 = vld [vmem:[#allocation7 + $0x3f8] sm:$0xff]
        %v507 = vld [vmem:[#allocation7 + $0x400] sm:$0xff]
        %v508 = vld [vmem:[#allocation7 + $0x408] sm:$0xff]
        %v509 = vld [vmem:[#allocation7 + $0x410] sm:$0xff]
        %v510 = vld [vmem:[#allocation7 + $0x418] sm:$0xff]
        %v511 = vld [vmem:[#allocation7 + $0x420] sm:$0xff]
        %v512 = vld [vmem:[#allocation7 + $0x428] sm:$0xff]
        %v513 = vld [vmem:[#allocation7 + $0x430] sm:$0xff]
        %v514 = vld [vmem:[#allocation7 + $0x438] sm:$0xff]
        %v515 = vld [vmem:[#allocation7 + $0x440] sm:$0xff]
        %v516 = vld [vmem:[#allocation7 + $0x448] sm:$0xff]
        %v517 = vld [vmem:[#allocation7 + $0x450] sm:$0xff]
        %v518 = vld [vmem:[#allocation7 + $0x458] sm:$0xff]
        %v519 = vld [vmem:[#allocation7 + $0x460] sm:$0xff]
        %v520 = vld [vmem:[#allocation7 + $0x468] sm:$0xff]
        %v521 = vld [vmem:[#allocation7 + $0x470] sm:$0xff]
        %v522 = vld [vmem:[#allocation7 + $0x478] sm:$0xff]
        %v523 = vld [vmem:[#allocation7 + $0x480] sm:$0xff]
        %v524 = vld [vmem:[#allocation7 + $0x488] sm:$0xff]
        %v525 = vld [vmem:[#allocation7 + $0x490] sm:$0xff]
        %v526 = vld [vmem:[#allocation7 + $0x498] sm:$0xff]
        %v527 = vld [vmem:[#allocation7 + $0x4a0] sm:$0xff]
        %v528 = vld [vmem:[#allocation7 + $0x4a8] sm:$0xff]
        %v529 = vld [vmem:[#allocation7 + $0x4b0] sm:$0xff]
        %v530 = vld [vmem:[#allocation7 + $0x4b8] sm:$0xff]
        %v531 = vld [vmem:[#allocation7 + $0x4c0] sm:$0xff]
        %v532 = vld [vmem:[#allocation7 + $0x4c8] sm:$0xff]
        %v533 = vld [vmem:[#allocation7 + $0x4d0] sm:$0xff]
        %v534 = vld [vmem:[#allocation7 + $0x4d8] sm:$0xff]
        %v535 = vld [vmem:[#allocation7 + $0x4e0] sm:$0xff]
        %v536 = vld [vmem:[#allocation7 + $0x4e8] sm:$0xff]
        %v537 = vld [vmem:[#allocation7 + $0x4f0] sm:$0xff]
        %v538 = vld [vmem:[#allocation7 + $0x4f8] sm:$0xff]
        %v539 = vld [vmem:[#allocation7 + $0x500] sm:$0xff]
        %v540 = vld [vmem:[#allocation7 + $0x508] sm:$0xff]
        %v541 = vld [vmem:[#allocation7 + $0x510] sm:$0xff]
        %v542 = vld [vmem:[#allocation7 + $0x518] sm:$0xff]
        %v543 = vld [vmem:[#allocation7 + $0x520] sm:$0xff]
        %v544 = vld [vmem:[#allocation7 + $0x528] sm:$0xff]
        %v545 = vld [vmem:[#allocation7 + $0x530] sm:$0xff]
        %v546 = vld [vmem:[#allocation7 + $0x538] sm:$0xff]
        %v547 = vld [vmem:[#allocation7 + $0x540] sm:$0xff]
        %v548 = vld [vmem:[#allocation7 + $0x548] sm:$0xff]
        %v549 = vld [vmem:[#allocation7 + $0x550] sm:$0xff]
        %v550 = vld [vmem:[#allocation7 + $0x558] sm:$0xff]
        %v551 = vld [vmem:[#allocation7 + $0x560] sm:$0xff]
        %v552 = vld [vmem:[#allocation7 + $0x568] sm:$0xff]
        %v553 = vld [vmem:[#allocation7 + $0x570] sm:$0xff]
        %v554 = vld [vmem:[#allocation7 + $0x578] sm:$0xff]
        %v555 = vld [vmem:[#allocation7 + $0x580] sm:$0xff]
        %v556 = vld [vmem:[#allocation7 + $0x588] sm:$0xff]
        %v557 = vld [vmem:[#allocation7 + $0x590] sm:$0xff]
        %v558 = vld [vmem:[#allocation7 + $0x598] sm:$0xff]
        %v559 = vld [vmem:[#allocation7 + $0x5a0] sm:$0xff]
        %v560 = vld [vmem:[#allocation7 + $0x5a8] sm:$0xff]
        %v561 = vld [vmem:[#allocation7 + $0x5b0] sm:$0xff]
        %v562 = vld [vmem:[#allocation7 + $0x5b8] sm:$0xff]
        %v563 = vld [vmem:[#allocation7 + $0x5c0] sm:$0xff]
        %v564 = vld [vmem:[#allocation7 + $0x5c8] sm:$0xff]
        %v565 = vld [vmem:[#allocation7 + $0x5d0] sm:$0xff]
        %v566 = vld [vmem:[#allocation7 + $0x5d8] sm:$0xff]
        %v567 = vld [vmem:[#allocation7 + $0x5e0] sm:$0xff]
        %v568 = vld [vmem:[#allocation7 + $0x5e8] sm:$0xff]
        %v569 = vld [vmem:[#allocation7 + $0x5f0] sm:$0xff]
        %v570 = vld [vmem:[#allocation7 + $0x5f8] sm:$0xff]
        %v571 = vld [vmem:[#allocation7 + $0x600] sm:$0xff]
        %v572 = vld [vmem:[#allocation7 + $0x608] sm:$0xff]
        %v573 = vld [vmem:[#allocation7 + $0x610] sm:$0xff]
        %v574 = vld [vmem:[#allocation7 + $0x618] sm:$0xff]
        %v575 = vld [vmem:[#allocation7 + $0x620] sm:$0xff]
        %v576 = vld [vmem:[#allocation7 + $0x628] sm:$0xff]
        %v577 = vld [vmem:[#allocation7 + $0x630] sm:$0xff]
        %v578 = vld [vmem:[#allocation7 + $0x638] sm:$0xff]
        %v579 = vld [vmem:[#allocation7 + $0x640] sm:$0xff]
        %v580 = vld [vmem:[#allocation7 + $0x648] sm:$0xff]
        %v581 = vld [vmem:[#allocation7 + $0x650] sm:$0xff]
        %v582 = vld [vmem:[#allocation7 + $0x658] sm:$0xff]
        %v583 = vld [vmem:[#allocation7 + $0x660] sm:$0xff]
        %v584 = vld [vmem:[#allocation7 + $0x668] sm:$0xff]
        %v585 = vld [vmem:[#allocation7 + $0x670] sm:$0xff]
        %v586 = vld [vmem:[#allocation7 + $0x678] sm:$0xff]
        %v587 = vld [vmem:[#allocation7 + $0x680] sm:$0xff]
        %v588 = vld [vmem:[#allocation7 + $0x688] sm:$0xff]
        %v589 = vld [vmem:[#allocation7 + $0x690] sm:$0xff]
        %v590 = vld [vmem:[#allocation7 + $0x698] sm:$0xff]
        %v591 = vld [vmem:[#allocation7 + $0x6a0] sm:$0xff]
        %v592 = vld [vmem:[#allocation7 + $0x6a8] sm:$0xff]
        %v593 = vld [vmem:[#allocation7 + $0x6b0] sm:$0xff]
        %v594 = vld [vmem:[#allocation7 + $0x6b8] sm:$0xff]
        %v595 = vld [vmem:[#allocation7 + $0x6c0] sm:$0xff]
        %v596 = vld [vmem:[#allocation7 + $0x6c8] sm:$0xff]
        %v597 = vld [vmem:[#allocation7 + $0x6d0] sm:$0xff]
        %v598 = vld [vmem:[#allocation7 + $0x6d8] sm:$0xff]
        %v599 = vld [vmem:[#allocation7 + $0x6e0] sm:$0xff]
        %v600 = vld [vmem:[#allocation7 + $0x6e8] sm:$0xff]
        %v601 = vld [vmem:[#allocation7 + $0x6f0] sm:$0xff]
        %v602 = vld [vmem:[#allocation7 + $0x6f8] sm:$0xff]
        %v603 = vld [vmem:[#allocation7 + $0x700] sm:$0xff]
        %v604 = vld [vmem:[#allocation7 + $0x708] sm:$0xff]
        %v605 = vld [vmem:[#allocation7 + $0x710] sm:$0xff]
        %v606 = vld [vmem:[#allocation7 + $0x718] sm:$0xff]
        %v607 = vld [vmem:[#allocation7 + $0x720] sm:$0xff]
        %v608 = vld [vmem:[#allocation7 + $0x728] sm:$0xff]
        %v609 = vld [vmem:[#allocation7 + $0x730] sm:$0xff]
        %v610 = vld [vmem:[#allocation7 + $0x738] sm:$0xff]
        %v611 = vld [vmem:[#allocation7 + $0x740] sm:$0xff]
        %v612 = vld [vmem:[#allocation7 + $0x748] sm:$0xff]
        %v613 = vld [vmem:[#allocation7 + $0x750] sm:$0xff]
        %v614 = vld [vmem:[#allocation7 + $0x758] sm:$0xff]
        %v615 = vld [vmem:[#allocation7 + $0x760] sm:$0xff]
        %v616 = vld [vmem:[#allocation7 + $0x768] sm:$0xff]
        %v617 = vld [vmem:[#allocation7 + $0x770] sm:$0xff]
        %v618 = vld [vmem:[#allocation7 + $0x778] sm:$0xff]
        %v619 = vld [vmem:[#allocation7 + $0x780] sm:$0xff]
        %v620 = vld [vmem:[#allocation7 + $0x788] sm:$0xff]
        %v621 = vld [vmem:[#allocation7 + $0x790] sm:$0xff]
        %v622 = vld [vmem:[#allocation7 + $0x798] sm:$0xff]
        %v623 = vld [vmem:[#allocation7 + $0x7a0] sm:$0xff]
        %v624 = vld [vmem:[#allocation7 + $0x7a8] sm:$0xff]
        %v625 = vld [vmem:[#allocation7 + $0x7b0] sm:$0xff]
        %v626 = vld [vmem:[#allocation7 + $0x7b8] sm:$0xff]
        %v627 = vld [vmem:[#allocation7 + $0x7c0] sm:$0xff]
        %v628 = vld [vmem:[#allocation7 + $0x7c8] sm:$0xff]
        %v629 = vld [vmem:[#allocation7 + $0x7d0] sm:$0xff]
        %v630 = vld [vmem:[#allocation7 + $0x7d8] sm:$0xff]
        %v631 = vld [vmem:[#allocation7 + $0x7e0] sm:$0xff]
        %v632 = vld [vmem:[#allocation7 + $0x7e8] sm:$0xff]
        %v633 = vld [vmem:[#allocation7 + $0x7f0] sm:$0xff]
        %v634 = vld [vmem:[#allocation7 + $0x7f8] sm:$0xff]
        %v635 = vld [vmem:[#allocation2] sm:$0xff]
        %v636 = vld [vmem:[#allocation9] sm:$0xff]
        %v637 = vld [vmem:[#allocation9 + $0x8] sm:$0xff]
        %v638 = vld [vmem:[#allocation9 + $0x10] sm:$0xff]
        %v639 = vld [vmem:[#allocation9 + $0x18] sm:$0xff]
        %v640 = vld [vmem:[#allocation9 + $0x20] sm:$0xff]
        %v641 = vld [vmem:[#allocation9 + $0x28] sm:$0xff]
        %v642 = vld [vmem:[#allocation9 + $0x30] sm:$0xff]
        %v643 = vld [vmem:[#allocation9 + $0x38] sm:$0xff]
        %v644 = vld [vmem:[#allocation9 + $0x40] sm:$0xff]
        %v645 = vld [vmem:[#allocation9 + $0x48] sm:$0xff]
        %v646 = vld [vmem:[#allocation9 + $0x50] sm:$0xff]
        %v647 = vld [vmem:[#allocation9 + $0x58] sm:$0xff]
        %v648 = vld [vmem:[#allocation9 + $0x60] sm:$0xff]
        %v649 = vld [vmem:[#allocation9 + $0x68] sm:$0xff]
        %v650 = vld [vmem:[#allocation9 + $0x70] sm:$0xff]
        %v651 = vld [vmem:[#allocation9 + $0x78] sm:$0xff]
        %v652 = vld [vmem:[#allocation9 + $0x80] sm:$0xff]
        %v653 = vld [vmem:[#allocation9 + $0x88] sm:$0xff]
        %v654 = vld [vmem:[#allocation9 + $0x90] sm:$0xff]
        %v655 = vld [vmem:[#allocation9 + $0x98] sm:$0xff]
        %v656 = vld [vmem:[#allocation9 + $0xa0] sm:$0xff]
        %v657 = vld [vmem:[#allocation9 + $0xa8] sm:$0xff]
        %v658 = vld [vmem:[#allocation9 + $0xb0] sm:$0xff]
        %v659 = vld [vmem:[#allocation9 + $0xb8] sm:$0xff]
        %v660 = vld [vmem:[#allocation9 + $0xc0] sm:$0xff]
        %v661 = vld [vmem:[#allocation9 + $0xc8] sm:$0xff]
        %v662 = vld [vmem:[#allocation9 + $0xd0] sm:$0xff]
        %v663 = vld [vmem:[#allocation9 + $0xd8] sm:$0xff]
        %v664 = vld [vmem:[#allocation9 + $0xe0] sm:$0xff]
        %v665 = vld [vmem:[#allocation9 + $0xe8] sm:$0xff]
        %v666 = vld [vmem:[#allocation9 + $0xf0] sm:$0xff]
        %v667 = vld [vmem:[#allocation9 + $0xf8] sm:$0xff]
        %v668 = vld [vmem:[#allocation9 + $0x100] sm:$0xff]
        %v669 = vld [vmem:[#allocation9 + $0x108] sm:$0xff]
        %v670 = vld [vmem:[#allocation9 + $0x110] sm:$0xff]
        %v671 = vld [vmem:[#allocation9 + $0x118] sm:$0xff]
        %v672 = vld [vmem:[#allocation9 + $0x120] sm:$0xff]
        %v673 = vld [vmem:[#allocation9 + $0x128] sm:$0xff]
        %v674 = vld [vmem:[#allocation9 + $0x130] sm:$0xff]
        %v675 = vld [vmem:[#allocation9 + $0x138] sm:$0xff]
        %v676 = vld [vmem:[#allocation9 + $0x140] sm:$0xff]
        %v677 = vld [vmem:[#allocation9 + $0x148] sm:$0xff]
        %v678 = vld [vmem:[#allocation9 + $0x150] sm:$0xff]
        %v679 = vld [vmem:[#allocation9 + $0x158] sm:$0xff]
        %v680 = vld [vmem:[#allocation9 + $0x160] sm:$0xff]
        %v681 = vld [vmem:[#allocation9 + $0x168] sm:$0xff]
        %v682 = vld [vmem:[#allocation9 + $0x170] sm:$0xff]
        %v683 = vld [vmem:[#allocation9 + $0x178] sm:$0xff]
        %v684 = vld [vmem:[#allocation9 + $0x180] sm:$0xff]
        %v685 = vld [vmem:[#allocation9 + $0x188] sm:$0xff]
        %v686 = vld [vmem:[#allocation9 + $0x190] sm:$0xff]
        %v687 = vld [vmem:[#allocation9 + $0x198] sm:$0xff]
        %v688 = vld [vmem:[#allocation9 + $0x1a0] sm:$0xff]
        %v689 = vld [vmem:[#allocation9 + $0x1a8] sm:$0xff]
        %v690 = vld [vmem:[#allocation9 + $0x1b0] sm:$0xff]
        %v691 = vld [vmem:[#allocation9 + $0x1b8] sm:$0xff]
        %v692 = vld [vmem:[#allocation9 + $0x1c0] sm:$0xff]
        %v693 = vld [vmem:[#allocation9 + $0x1c8] sm:$0xff]
        %v694 = vld [vmem:[#allocation9 + $0x1d0] sm:$0xff]
        %v695 = vld [vmem:[#allocation9 + $0x1d8] sm:$0xff]
        %v696 = vld [vmem:[#allocation9 + $0x1e0] sm:$0xff]
        %v697 = vld [vmem:[#allocation9 + $0x1e8] sm:$0xff]
        %v698 = vld [vmem:[#allocation9 + $0x1f0] sm:$0xff]
        %v699 = vld [vmem:[#allocation9 + $0x1f8] sm:$0xff]
        %700 = vmatprep.subr.mxu0 %v637
        %701 = vmatpush1.msra.mxu0 %v636
        %702 = vmatprep.subr.mxu0 %v641
        %703 = vmatpush1.msra.mxu0 %v640
        %704 = vmatprep.subr.mxu0 %v645
        %705 = vmatpush1.msra.mxu0 %v644
        %706 = vmatprep.subr.mxu0 %v649
        %707 = vmatpush1.msra.mxu0 %v648
        %708 = vmatprep.subr.mxu0 %v653
        %709 = vmatpush1.msra.mxu0 %v652
        %710 = vmatprep.subr.mxu0 %v657
        %711 = vmatpush1.msra.mxu0 %v656
        %712 = vmatprep.subr.mxu0 %v661
        %713 = vmatpush1.msra.mxu0 %v660
        %714 = vmatprep.subr.mxu0 %v665
        %715 = vmatpush1.msra.mxu0 %v664
        %716 = vmatprep.subr.mxu0 %v669
        %717 = vmatpush1.msra.mxu0 %v668
        %718 = vmatprep.subr.mxu0 %v673
        %719 = vmatpush1.msra.mxu0 %v672
        %720 = vmatprep.subr.mxu0 %v677
        %721 = vmatpush1.msra.mxu0 %v676
        %722 = vmatprep.subr.mxu0 %v681
        %723 = vmatpush1.msra.mxu0 %v680
        %724 = vmatprep.subr.mxu0 %v685
        %725 = vmatpush1.msra.mxu0 %v684
        %726 = vmatprep.subr.mxu0 %v689
        %727 = vmatpush1.msra.mxu0 %v688
        %728 = vmatprep.subr.mxu0 %v693
        %729 = vmatpush1.msra.mxu0 %v692
        %730 = vmatprep.subr.mxu0 %v697
        %731 = vmatpush1.msra.mxu0 %v696
        %732 = vmatprep.subr.mxu0 0.0
        %733 = vmatpush1.msra.mxu0 0.0
        %734 = vmatprep.subr.mxu0 0.0
        %735 = vmatpush1.msra.mxu0 0.0
        %736 = vmatprep.subr.mxu0 0.0
        %737 = vmatpush1.msra.mxu0 0.0
        %738 = vmatprep.subr.mxu0 0.0
        %739 = vmatpush1.msra.mxu0 0.0
        %740 = vmatprep.subr.mxu0 0.0
        %741 = vmatpush1.msra.mxu0 0.0
        %742 = vmatprep.subr.mxu0 0.0
        %743 = vmatpush1.msra.mxu0 0.0
        %744 = vmatprep.subr.mxu0 0.0
        %745 = vmatpush1.msra.mxu0 0.0
        %746 = vmatprep.subr.mxu0 0.0
        %747 = vmatpush1.msra.mxu0 0.0
        %748 = vmatprep.subr.mxu0 0.0
        %749 = vmatpush1.msra.mxu0 0.0
        %750 = vmatprep.subr.mxu0 0.0
        %751 = vmatpush1.msra.mxu0 0.0
        %752 = vmatprep.subr.mxu0 0.0
        %753 = vmatpush1.msra.mxu0 0.0
        %754 = vmatprep.subr.mxu0 0.0
        %755 = vmatpush1.msra.mxu0 0.0
        %756 = vmatprep.subr.mxu0 0.0
        %757 = vmatpush1.msra.mxu0 0.0
        %758 = vmatprep.subr.mxu0 0.0
        %759 = vmatpush1.msra.mxu0 0.0
        %760 = vmatprep.subr.mxu0 0.0
        %761 = vmatpush1.msra.mxu0 0.0
        %762 = vmatprep.subr.mxu0 0.0
        %763 = vmatpush1.msra.mxu0 0.0
        %764 = vmatprep.mubr.f32.mxu0 0.0
        %765 = vmatmul.mubr.f32.gmra.mrb[0].mxu0 %v635
        %v766 = vpop.f32.mrb[0].mxu0
        %v767 = vadd.f32 0.0, %v766
        %v768 = vpop.f32.mrb[0].mxu0
        %v769 = vadd.f32 0.0, %v768
        %770 = vdwg.mxu0
        %771 = vmatprep.subr.mxu0 %v639
        %772 = vmatpush1.msra.mxu0 %v638
        %773 = vmatprep.subr.mxu0 %v643
        %774 = vmatpush1.msra.mxu0 %v642
        %775 = vmatprep.subr.mxu0 %v647
        %776 = vmatpush1.msra.mxu0 %v646
        %777 = vmatprep.subr.mxu0 %v651
        %778 = vmatpush1.msra.mxu0 %v650
        %779 = vmatprep.subr.mxu0 %v655
        %780 = vmatpush1.msra.mxu0 %v654
        %781 = vmatprep.subr.mxu0 %v659
        %782 = vmatpush1.msra.mxu0 %v658
        %783 = vmatprep.subr.mxu0 %v663
        %784 = vmatpush1.msra.mxu0 %v662
        %785 = vmatprep.subr.mxu0 %v667
        %786 = vmatpush1.msra.mxu0 %v666
        %787 = vmatprep.subr.mxu0 %v671
        %788 = vmatpush1.msra.mxu0 %v670
        %789 = vmatprep.subr.mxu0 %v675
        %790 = vmatpush1.msra.mxu0 %v674
        %791 = vmatprep.subr.mxu0 %v679
        %792 = vmatpush1.msra.mxu0 %v678
        %793 = vmatprep.subr.mxu0 %v683
        %794 = vmatpush1.msra.mxu0 %v682
        %795 = vmatprep.subr.mxu0 %v687
        %796 = vmatpush1.msra.mxu0 %v686
        %797 = vmatprep.subr.mxu0 %v691
        %798 = vmatpush1.msra.mxu0 %v690
        %799 = vmatprep.subr.mxu0 %v695
        %800 = vmatpush1.msra.mxu0 %v694
        %801 = vmatprep.subr.mxu0 %v699
        %802 = vmatpush1.msra.mxu0 %v698
        %803 = vmatprep.subr.mxu0 0.0
        %804 = vmatpush1.msra.mxu0 0.0
        %805 = vmatprep.subr.mxu0 0.0
        %806 = vmatpush1.msra.mxu0 0.0
        %807 = vmatprep.subr.mxu0 0.0
        %808 = vmatpush1.msra.mxu0 0.0
        %809 = vmatprep.subr.mxu0 0.0
        %810 = vmatpush1.msra.mxu0 0.0
        %811 = vmatprep.subr.mxu0 0.0
        %812 = vmatpush1.msra.mxu0 0.0
        %813 = vmatprep.subr.mxu0 0.0
        %814 = vmatpush1.msra.mxu0 0.0
        %815 = vmatprep.subr.mxu0 0.0
        %816 = vmatpush1.msra.mxu0 0.0
        %817 = vmatprep.subr.mxu0 0.0
        %818 = vmatpush1.msra.mxu0 0.0
        %819 = vmatprep.subr.mxu0 0.0
        %820 = vmatpush1.msra.mxu0 0.0
        %821 = vmatprep.subr.mxu0 0.0
        %822 = vmatpush1.msra.mxu0 0.0
        %823 = vmatprep.subr.mxu0 0.0
        %824 = vmatpush1.msra.mxu0 0.0
        %825 = vmatprep.subr.mxu0 0.0
        %826 = vmatpush1.msra.mxu0 0.0
        %827 = vmatprep.subr.mxu0 0.0
        %828 = vmatpush1.msra.mxu0 0.0
        %829 = vmatprep.subr.mxu0 0.0
        %830 = vmatpush1.msra.mxu0 0.0
        %831 = vmatprep.subr.mxu0 0.0
        %832 = vmatpush1.msra.mxu0 0.0
        %833 = vmatprep.subr.mxu0 0.0
        %834 = vmatpush1.msra.mxu0 0.0
        %835 = vmatprep.mubr.f32.mxu0 0.0
        %836 = vmatmul.mubr.f32.gmra.mrb[0].mxu0 %v635
        %v837 = vpop.f32.mrb[0].mxu0
        %v838 = vadd.f32 0.0, %v837
        %v839 = vpop.f32.mrb[0].mxu0
        %v840 = vadd.f32 0.0, %v839
        %841 = vdwg.mxu0
        %842 = vmatprep.subr.mxu0 %v380
        %843 = vmatpush1.msra.mxu0 %v379
        %844 = vmatprep.subr.mxu0 %v384
        %845 = vmatpush1.msra.mxu0 %v383
        %846 = vmatprep.subr.mxu0 %v388
        %847 = vmatpush1.msra.mxu0 %v387
        %848 = vmatprep.subr.mxu0 %v392
        %849 = vmatpush1.msra.mxu0 %v391
        %850 = vmatprep.subr.mxu0 %v396
        %851 = vmatpush1.msra.mxu0 %v395
        %852 = vmatprep.subr.mxu0 %v400
        %853 = vmatpush1.msra.mxu0 %v399
        %854 = vmatprep.subr.mxu0 %v404
        %855 = vmatpush1.msra.mxu0 %v403
        %856 = vmatprep.subr.mxu0 %v408
        %857 = vmatpush1.msra.mxu0 %v407
        %858 = vmatprep.subr.mxu0 %v412
        %859 = vmatpush1.msra.mxu0 %v411
        %860 = vmatprep.subr.mxu0 %v416
        %861 = vmatpush1.msra.mxu0 %v415
        %862 = vmatprep.subr.mxu0 %v420
        %863 = vmatpush1.msra.mxu0 %v419
        %864 = vmatprep.subr.mxu0 %v424
        %865 = vmatpush1.msra.mxu0 %v423
        %866 = vmatprep.subr.mxu0 %v428
        %867 = vmatpush1.msra.mxu0 %v427
        %868 = vmatprep.subr.mxu0 %v432
        %869 = vmatpush1.msra.mxu0 %v431
        %870 = vmatprep.subr.mxu0 %v436
        %871 = vmatpush1.msra.mxu0 %v435
        %872 = vmatprep.subr.mxu0 %v440
        %873 = vmatpush1.msra.mxu0 %v439
        %874 = vmatprep.subr.mxu0 %v444
        %875 = vmatpush1.msra.mxu0 %v443
        %876 = vmatprep.subr.mxu0 %v448
        %877 = vmatpush1.msra.mxu0 %v447
        %878 = vmatprep.subr.mxu0 %v452
        %879 = vmatpush1.msra.mxu0 %v451
        %880 = vmatprep.subr.mxu0 %v456
        %881 = vmatpush1.msra.mxu0 %v455
        %882 = vmatprep.subr.mxu0 %v460
        %883 = vmatpush1.msra.mxu0 %v459
        %884 = vmatprep.subr.mxu0 %v464
        %885 = vmatpush1.msra.mxu0 %v463
        %886 = vmatprep.subr.mxu0 %v468
        %887 = vmatpush1.msra.mxu0 %v467
        %888 = vmatprep.subr.mxu0 %v472
        %889 = vmatpush1.msra.mxu0 %v471
        %890 = vmatprep.subr.mxu0 %v476
        %891 = vmatpush1.msra.mxu0 %v475
        %892 = vmatprep.subr.mxu0 %v480
        %893 = vmatpush1.msra.mxu0 %v479
        %894 = vmatprep.subr.mxu0 %v484
        %895 = vmatpush1.msra.mxu0 %v483
        %896 = vmatprep.subr.mxu0 %v488
        %897 = vmatpush1.msra.mxu0 %v487
        %898 = vmatprep.subr.mxu0 %v492
        %899 = vmatpush1.msra.mxu0 %v491
        %900 = vmatprep.subr.mxu0 %v496
        %901 = vmatpush1.msra.mxu0 %v495
        %902 = vmatprep.subr.mxu0 %v500
        %903 = vmatpush1.msra.mxu0 %v499
        %904 = vmatprep.subr.mxu0 %v504
        %905 = vmatpush1.msra.mxu0 %v503
        %906 = vmatprep.mubr.f32.mxu0 %v376
        %907 = vmatmul.mubr.f32.gmra.mrb[0].mxu0 %v375
        %v908 = vpop.f32.mrb[0].mxu0
        %v909 = vadd.f32 %v767, %v908
        %v910 = vpop.f32.mrb[0].mxu0
        %v911 = vadd.f32 %v769, %v910
        %912 = vdwg.mxu0
        %913 = vmatprep.subr.mxu0 %v508
        %914 = vmatpush1.msra.mxu0 %v507
        %915 = vmatprep.subr.mxu0 %v512
        %916 = vmatpush1.msra.mxu0 %v511
        %917 = vmatprep.subr.mxu0 %v516
        %918 = vmatpush1.msra.mxu0 %v515
        %919 = vmatprep.subr.mxu0 %v520
        %920 = vmatpush1.msra.mxu0 %v519
        %921 = vmatprep.subr.mxu0 %v524
        %922 = vmatpush1.msra.mxu0 %v523
        %923 = vmatprep.subr.mxu0 %v528
        %924 = vmatpush1.msra.mxu0 %v527
        %925 = vmatprep.subr.mxu0 %v532
        %926 = vmatpush1.msra.mxu0 %v531
        %927 = vmatprep.subr.mxu0 %v536
        %928 = vmatpush1.msra.mxu0 %v535
        %929 = vmatprep.subr.mxu0 %v540
        %930 = vmatpush1.msra.mxu0 %v539
        %931 = vmatprep.subr.mxu0 %v544
        %932 = vmatpush1.msra.mxu0 %v543
        %933 = vmatprep.subr.mxu0 %v548
        %934 = vmatpush1.msra.mxu0 %v547
        %935 = vmatprep.subr.mxu0 %v552
        %936 = vmatpush1.msra.mxu0 %v551
        %937 = vmatprep.subr.mxu0 %v556
        %938 = vmatpush1.msra.mxu0 %v555
        %939 = vmatprep.subr.mxu0 %v560
        %940 = vmatpush1.msra.mxu0 %v559
        %941 = vmatprep.subr.mxu0 %v564
        %942 = vmatpush1.msra.mxu0 %v563
        %943 = vmatprep.subr.mxu0 %v568
        %944 = vmatpush1.msra.mxu0 %v567
        %945 = vmatprep.subr.mxu0 %v572
        %946 = vmatpush1.msra.mxu0 %v571
        %947 = vmatprep.subr.mxu0 %v576
        %948 = vmatpush1.msra.mxu0 %v575
        %949 = vmatprep.subr.mxu0 %v580
        %950 = vmatpush1.msra.mxu0 %v579
        %951 = vmatprep.subr.mxu0 %v584
        %952 = vmatpush1.msra.mxu0 %v583
        %953 = vmatprep.subr.mxu0 %v588
        %954 = vmatpush1.msra.mxu0 %v587
        %955 = vmatprep.subr.mxu0 %v592
        %956 = vmatpush1.msra.mxu0 %v591
        %957 = vmatprep.subr.mxu0 %v596
        %958 = vmatpush1.msra.mxu0 %v595
        %959 = vmatprep.subr.mxu0 %v600
        %960 = vmatpush1.msra.mxu0 %v599
        %961 = vmatprep.subr.mxu0 %v604
        %962 = vmatpush1.msra.mxu0 %v603
        %963 = vmatprep.subr.mxu0 %v608
        %964 = vmatpush1.msra.mxu0 %v607
        %965 = vmatprep.subr.mxu0 %v612
        %966 = vmatpush1.msra.mxu0 %v611
        %967 = vmatprep.subr.mxu0 %v616
        %968 = vmatpush1.msra.mxu0 %v615
        %969 = vmatprep.subr.mxu0 %v620
        %970 = vmatpush1.msra.mxu0 %v619
        %971 = vmatprep.subr.mxu0 %v624
        %972 = vmatpush1.msra.mxu0 %v623
        %973 = vmatprep.subr.mxu0 %v628
        %974 = vmatpush1.msra.mxu0 %v627
        %975 = vmatprep.subr.mxu0 %v632
        %976 = vmatpush1.msra.mxu0 %v631
        %977 = vmatprep.mubr.f32.mxu0 %v378
        %978 = vmatmul.mubr.f32.gmra.mrb[0].mxu0 %v377
        %v979 = vpop.f32.mrb[0].mxu0
        %v980 = vadd.f32 %v909, %v979
        %v981 = vpop.f32.mrb[0].mxu0
        %v982 = vadd.f32 %v911, %v981
        %983 = vdwg.mxu0
        %984 = vmatprep.subr.mxu0 %v382
        %985 = vmatpush1.msra.mxu0 %v381
        %986 = vmatprep.subr.mxu0 %v386
        %987 = vmatpush1.msra.mxu0 %v385
        %988 = vmatprep.subr.mxu0 %v390
        %989 = vmatpush1.msra.mxu0 %v389
        %990 = vmatprep.subr.mxu0 %v394
        %991 = vmatpush1.msra.mxu0 %v393
        %992 = vmatprep.subr.mxu0 %v398
        %993 = vmatpush1.msra.mxu0 %v397
        %994 = vmatprep.subr.mxu0 %v402
        %995 = vmatpush1.msra.mxu0 %v401
        %996 = vmatprep.subr.mxu0 %v406
        %997 = vmatpush1.msra.mxu0 %v405
        %998 = vmatprep.subr.mxu0 %v410
        %999 = vmatpush1.msra.mxu0 %v409
        %1000 = vmatprep.subr.mxu0 %v414
        %1001 = vmatpush1.msra.mxu0 %v413
        %1002 = vmatprep.subr.mxu0 %v418
        %1003 = vmatpush1.msra.mxu0 %v417
        %1004 = vmatprep.subr.mxu0 %v422
        %1005 = vmatpush1.msra.mxu0 %v421
        %1006 = vmatprep.subr.mxu0 %v426
        %1007 = vmatpush1.msra.mxu0 %v425
        %1008 = vmatprep.subr.mxu0 %v430
        %1009 = vmatpush1.msra.mxu0 %v429
        %1010 = vmatprep.subr.mxu0 %v434
        %1011 = vmatpush1.msra.mxu0 %v433
        %1012 = vmatprep.subr.mxu0 %v438
        %1013 = vmatpush1.msra.mxu0 %v437
        %1014 = vmatprep.subr.mxu0 %v442
        %1015 = vmatpush1.msra.mxu0 %v441
        %1016 = vmatprep.subr.mxu0 %v446
        %1017 = vmatpush1.msra.mxu0 %v445
        %1018 = vmatprep.subr.mxu0 %v450
        %1019 = vmatpush1.msra.mxu0 %v449
        %1020 = vmatprep.subr.mxu0 %v454
        %1021 = vmatpush1.msra.mxu0 %v453
        %1022 = vmatprep.subr.mxu0 %v458
        %1023 = vmatpush1.msra.mxu0 %v457
        %1024 = vmatprep.subr.mxu0 %v462
        %1025 = vmatpush1.msra.mxu0 %v461
        %1026 = vmatprep.subr.mxu0 %v466
        %1027 = vmatpush1.msra.mxu0 %v465
        %1028 = vmatprep.subr.mxu0 %v470
        %1029 = vmatpush1.msra.mxu0 %v469
        %1030 = vmatprep.subr.mxu0 %v474
        %1031 = vmatpush1.msra.mxu0 %v473
        %1032 = vmatprep.subr.mxu0 %v478
        %1033 = vmatpush1.msra.mxu0 %v477
        %1034 = vmatprep.subr.mxu0 %v482
        %1035 = vmatpush1.msra.mxu0 %v481
        %1036 = vmatprep.subr.mxu0 %v486
        %1037 = vmatpush1.msra.mxu0 %v485
        %1038 = vmatprep.subr.mxu0 %v490
        %1039 = vmatpush1.msra.mxu0 %v489
        %1040 = vmatprep.subr.mxu0 %v494
        %1041 = vmatpush1.msra.mxu0 %v493
        %1042 = vmatprep.subr.mxu0 %v498
        %1043 = vmatpush1.msra.mxu0 %v497
        %1044 = vmatprep.subr.mxu0 %v502
        %1045 = vmatpush1.msra.mxu0 %v501
        %1046 = vmatprep.subr.mxu0 %v506
        %1047 = vmatpush1.msra.mxu0 %v505
        %1048 = vmatprep.mubr.f32.mxu0 %v376
        %1049 = vmatmul.mubr.f32.gmra.mrb[0].mxu0 %v375
        %v1050 = vpop.f32.mrb[0].mxu0
        %v1051 = vadd.f32 %v838, %v1050
        %v1052 = vpop.f32.mrb[0].mxu0
        %v1053 = vadd.f32 %v840, %v1052
        %1054 = vdwg.mxu0
        %1055 = vmatprep.subr.mxu0 %v510
        %1056 = vmatpush1.msra.mxu0 %v509
        %1057 = vmatprep.subr.mxu0 %v514
        %1058 = vmatpush1.msra.mxu0 %v513
        %1059 = vmatprep.subr.mxu0 %v518
        %1060 = vmatpush1.msra.mxu0 %v517
        %1061 = vmatprep.subr.mxu0 %v522
        %1062 = vmatpush1.msra.mxu0 %v521
        %1063 = vmatprep.subr.mxu0 %v526
        %1064 = vmatpush1.msra.mxu0 %v525
        %1065 = vmatprep.subr.mxu0 %v530
        %1066 = vmatpush1.msra.mxu0 %v529
        %1067 = vmatprep.subr.mxu0 %v534
        %1068 = vmatpush1.msra.mxu0 %v533
        %1069 = vmatprep.subr.mxu0 %v538
        %1070 = vmatpush1.msra.mxu0 %v537
        %1071 = vmatprep.subr.mxu0 %v542
        %1072 = vmatpush1.msra.mxu0 %v541
        %1073 = vmatprep.subr.mxu0 %v546
        %1074 = vmatpush1.msra.mxu0 %v545
        %1075 = vmatprep.subr.mxu0 %v550
        %1076 = vmatpush1.msra.mxu0 %v549
        %1077 = vmatprep.subr.mxu0 %v554
        %1078 = vmatpush1.msra.mxu0 %v553
        %1079 = vmatprep.subr.mxu0 %v558
        %1080 = vmatpush1.msra.mxu0 %v557
        %1081 = vmatprep.subr.mxu0 %v562
        %1082 = vmatpush1.msra.mxu0 %v561
        %1083 = vmatprep.subr.mxu0 %v566
        %1084 = vmatpush1.msra.mxu0 %v565
        %1085 = vmatprep.subr.mxu0 %v570
        %1086 = vmatpush1.msra.mxu0 %v569
        %1087 = vmatprep.subr.mxu0 %v574
        %1088 = vmatpush1.msra.mxu0 %v573
        %1089 = vmatprep.subr.mxu0 %v578
        %1090 = vmatpush1.msra.mxu0 %v577
        %1091 = vmatprep.subr.mxu0 %v582
        %1092 = vmatpush1.msra.mxu0 %v581
        %1093 = vmatprep.subr.mxu0 %v586
        %1094 = vmatpush1.msra.mxu0 %v585
        %1095 = vmatprep.subr.mxu0 %v590
        %1096 = vmatpush1.msra.mxu0 %v589
        %1097 = vmatprep.subr.mxu0 %v594
        %1098 = vmatpush1.msra.mxu0 %v593
        %1099 = vmatprep.subr.mxu0 %v598
        %1100 = vmatpush1.msra.mxu0 %v597
        %1101 = vmatprep.subr.mxu0 %v602
        %1102 = vmatpush1.msra.mxu0 %v601
        %1103 = vmatprep.subr.mxu0 %v606
        %1104 = vmatpush1.msra.mxu0 %v605
        %1105 = vmatprep.subr.mxu0 %v610
        %1106 = vmatpush1.msra.mxu0 %v609
        %1107 = vmatprep.subr.mxu0 %v614
        %1108 = vmatpush1.msra.mxu0 %v613
        %1109 = vmatprep.subr.mxu0 %v618
        %1110 = vmatpush1.msra.mxu0 %v617
        %1111 = vmatprep.subr.mxu0 %v622
        %1112 = vmatpush1.msra.mxu0 %v621
        %1113 = vmatprep.subr.mxu0 %v626
        %1114 = vmatpush1.msra.mxu0 %v625
        %1115 = vmatprep.subr.mxu0 %v630
        %1116 = vmatpush1.msra.mxu0 %v629
        %1117 = vmatprep.subr.mxu0 %v634
        %1118 = vmatpush1.msra.mxu0 %v633
        %1119 = vmatprep.mubr.f32.mxu0 %v378
        %1120 = vmatmul.mubr.f32.gmra.mrb[0].mxu0 %v377
        %v1121 = vpop.f32.mrb[0].mxu0
        %v1122 = vadd.f32 %v1051, %v1121
        %v1123 = vpop.f32.mrb[0].mxu0
        %v1124 = vadd.f32 %v1053, %v1123
        %1125 = vdwg.mxu0
        %v1126 = vld [vmem:[%s3] sm:$0xf]
        %v1128 = vlaneseq
        %v1129 = vshrl.u32 %v1128, 7
        %v1130 = vsub.s32 0, %v1129
        %v1131 = vrot.slane %v1126, %v1130
        %v1132 = vlaneseq
        %v1133 = vshrl.u32 %v1132, 7
        %v1134 = vsub.s32 1, %v1133
        %v1135 = vrot.slane %v1126, %v1134
        %v1136 = vlaneseq
        %v1137 = vshrl.u32 %v1136, 7
        %v1138 = vsub.s32 2, %v1137
        %v1139 = vrot.slane %v1126, %v1138
        %v1140 = vlaneseq
        %v1141 = vshrl.u32 %v1140, 7
        %v1142 = vsub.s32 3, %v1141
        %v1143 = vrot.slane %v1126, %v1142
        %v1148 = vadd.f32 %v980, %v1131
        %v1149 = vadd.f32 %v982, %v1135
        %v1150 = vadd.f32 %v1122, %v1139
        %v1151 = vadd.f32 %v1124, %v1143
        %v1152 = vsub.f32 0.0, %v1148
        %v1153 = vmul.f32 %v1152, 1.442695
        %v1154 = vpow.pop %v1153
        %v1155 = vadd.f32 %v1154, 1.0
        %v1156 = vrcp.pop %v1155
        %v1157 = vmul.f32 1.0, %v1156
        %v1158 = vsub.f32 0.0, %v1149
        %v1159 = vmul.f32 %v1158, 1.442695
        %v1160 = vpow.pop %v1159
        %v1161 = vadd.f32 %v1160, 1.0
        %v1162 = vrcp.pop %v1161
        %v1163 = vmul.f32 1.0, %v1162
        %v1164 = vtanh.pop %v1150
        %v1165 = vsub.f32 0.0, %v1151
        %v1166 = vmul.f32 %v1165, 1.442695
        %v1167 = vpow.pop %v1166
        %v1168 = vadd.f32 %v1167, 1.0
        %v1169 = vrcp.pop %v1168
        %v1170 = vmul.f32 1.0, %v1169
        %v1171 = vld [vmem:[#allocation3] sm:$0xff]
        %v1172 = vmul.f32 %v1163, %v1171
        %v1173 = vmul.f32 %v1157, %v1164
        %v1174 = vadd.f32 %v1172, %v1173
        %v1175 = vtanh.pop %v1174
        %v1176 = vmul.f32 %v1170, %v1175
        %1177 = vst [vmem:[#allocation3] sm:$0xff] %v1174
        %1178 = vst [vmem:[#allocation2] sm:$0xff] %v1176
        %p1179 = scmp.eq.s32.totalorder %s25, 7
        // Predicated region
        $region77: #{tpu_custom_call.1} parent=51 // pred_check
          %p1180 = pneg %p1179
        $region78: #{tpu_custom_call.1} parent=51 // pred_check_branch
          %1182 = sbr.rel (%p1180) target = $region80
        $region79: #{tpu_custom_call.1} parent=51 // pred_region
          %v1183 = vld [vmem:[#allocation10] sm:$0xff]
          %v1184 = vld [vmem:[#allocation10 + $0x8] sm:$0xff]
          %v1185 = vld [vmem:[#allocation10 + $0x10] sm:$0xff]
          %v1186 = vld [vmem:[#allocation10 + $0x18] sm:$0xff]
          %v1187 = vld [vmem:[#allocation10 + $0x20] sm:$0xff]
          %v1188 = vld [vmem:[#allocation10 + $0x28] sm:$0xff]
          %v1189 = vld [vmem:[#allocation10 + $0x30] sm:$0xff]
          %v1190 = vld [vmem:[#allocation10 + $0x38] sm:$0xff]
          %v1191 = vld [vmem:[#allocation10 + $0x40] sm:$0xff]
          %v1192 = vld [vmem:[#allocation10 + $0x48] sm:$0xff]
          %v1193 = vld [vmem:[#allocation10 + $0x50] sm:$0xff]
          %v1194 = vld [vmem:[#allocation10 + $0x58] sm:$0xff]
          %v1195 = vld [vmem:[#allocation10 + $0x60] sm:$0xff]
          %v1196 = vld [vmem:[#allocation10 + $0x68] sm:$0xff]
          %v1197 = vld [vmem:[#allocation10 + $0x70] sm:$0xff]
          %v1198 = vld [vmem:[#allocation10 + $0x78] sm:$0xff]
          %v1199 = vld [vmem:[%s5] sm:$0x1]
          %v1201 = vlaneseq
          %v1202 = vshrl.u32 %v1201, 7
          %v1203 = vsub.s32 0, %v1202
          %v1204 = vrot.slane %v1199, %v1203
          %1206 = vmatprep.subr.mxu0 0.0
          %1207 = vmatpush1.msra.mxu0 %v1183
          %1208 = vmatprep.subr.mxu0 0.0
          %1209 = vmatpush1.msra.mxu0 %v1184
          %1210 = vmatprep.subr.mxu0 0.0
          %1211 = vmatpush1.msra.mxu0 %v1185
          %1212 = vmatprep.subr.mxu0 0.0
          %1213 = vmatpush1.msra.mxu0 %v1186
          %1214 = vmatprep.subr.mxu0 0.0
          %1215 = vmatpush1.msra.mxu0 %v1187
          %1216 = vmatprep.subr.mxu0 0.0
          %1217 = vmatpush1.msra.mxu0 %v1188
          %1218 = vmatprep.subr.mxu0 0.0
          %1219 = vmatpush1.msra.mxu0 %v1189
          %1220 = vmatprep.subr.mxu0 0.0
          %1221 = vmatpush1.msra.mxu0 %v1190
          %1222 = vmatprep.subr.mxu0 0.0
          %1223 = vmatpush1.msra.mxu0 %v1191
          %1224 = vmatprep.subr.mxu0 0.0
          %1225 = vmatpush1.msra.mxu0 %v1192
          %1226 = vmatprep.subr.mxu0 0.0
          %1227 = vmatpush1.msra.mxu0 %v1193
          %1228 = vmatprep.subr.mxu0 0.0
          %1229 = vmatpush1.msra.mxu0 %v1194
          %1230 = vmatprep.subr.mxu0 0.0
          %1231 = vmatpush1.msra.mxu0 %v1195
          %1232 = vmatprep.subr.mxu0 0.0
          %1233 = vmatpush1.msra.mxu0 %v1196
          %1234 = vmatprep.subr.mxu0 0.0
          %1235 = vmatpush1.msra.mxu0 %v1197
          %1236 = vmatprep.subr.mxu0 0.0
          %1237 = vmatpush1.msra.mxu0 %v1198
          %1238 = vmatprep.subr.mxu0 0.0
          %1239 = vmatpush1.msra.mxu0 0.0
          %1240 = vmatprep.subr.mxu0 0.0
          %1241 = vmatpush1.msra.mxu0 0.0
          %1242 = vmatprep.subr.mxu0 0.0
          %1243 = vmatpush1.msra.mxu0 0.0
          %1244 = vmatprep.subr.mxu0 0.0
          %1245 = vmatpush1.msra.mxu0 0.0
          %1246 = vmatprep.subr.mxu0 0.0
          %1247 = vmatpush1.msra.mxu0 0.0
          %1248 = vmatprep.subr.mxu0 0.0
          %1249 = vmatpush1.msra.mxu0 0.0
          %1250 = vmatprep.subr.mxu0 0.0
          %1251 = vmatpush1.msra.mxu0 0.0
          %1252 = vmatprep.subr.mxu0 0.0
          %1253 = vmatpush1.msra.mxu0 0.0
          %1254 = vmatprep.subr.mxu0 0.0
          %1255 = vmatpush1.msra.mxu0 0.0
          %1256 = vmatprep.subr.mxu0 0.0
          %1257 = vmatpush1.msra.mxu0 0.0
          %1258 = vmatprep.subr.mxu0 0.0
          %1259 = vmatpush1.msra.mxu0 0.0
          %1260 = vmatprep.subr.mxu0 0.0
          %1261 = vmatpush1.msra.mxu0 0.0
          %1262 = vmatprep.subr.mxu0 0.0
          %1263 = vmatpush1.msra.mxu0 0.0
          %1264 = vmatprep.subr.mxu0 0.0
          %1265 = vmatpush1.msra.mxu0 0.0
          %1266 = vmatprep.subr.mxu0 0.0
          %1267 = vmatpush1.msra.mxu0 0.0
          %1268 = vmatprep.subr.mxu0 0.0
          %1269 = vmatpush1.msra.mxu0 0.0
          %1270 = vmatprep.mubr.f32.mxu0 0.0
          %1271 = vmatmul.mubr.f32.gmra.mrb[0].mxu0 %v1176
          %v1272 = vpop.f32.mrb[0].mxu0
          %v1273 = vadd.f32 %v1204, %v1272
          %v1274 = vpop.f32.mrb[0].mxu0
          %1275 = vdwg.mxu0
          %vm1276 = vcmp.gt.f32.partialorder %v1273, 0.0
          %v1277 = vmin.f32 %v1273, 0.0
          %v1278 = vmul.f32 %v1277, 1.442695
          %v1279 = vpow.pop %v1278
          %v1280 = vsub.f32 %v1279, 1.0
          %v1281 = vsel %vm1276, %v1273, %v1280
          %v1282 = vld [vmem:[#allocation12] sm:$0xff]
          %v1283 = vld [vmem:[#allocation12 + $0x8] sm:$0xff]
          %v1284 = vld [vmem:[#allocation12 + $0x10] sm:$0xff]
          %v1285 = vld [vmem:[#allocation12 + $0x18] sm:$0xff]
          %v1286 = vld [vmem:[#allocation12 + $0x20] sm:$0xff]
          %v1287 = vld [vmem:[#allocation12 + $0x28] sm:$0xff]
          %v1288 = vld [vmem:[#allocation12 + $0x30] sm:$0xff]
          %v1289 = vld [vmem:[#allocation12 + $0x38] sm:$0xff]
          %v1290 = vld [vmem:[#allocation12 + $0x40] sm:$0xff]
          %v1291 = vld [vmem:[#allocation12 + $0x48] sm:$0xff]
          %v1292 = vld [vmem:[#allocation12 + $0x50] sm:$0xff]
          %v1293 = vld [vmem:[#allocation12 + $0x58] sm:$0xff]
          %v1294 = vld [vmem:[#allocation12 + $0x60] sm:$0xff]
          %v1295 = vld [vmem:[#allocation12 + $0x68] sm:$0xff]
          %v1296 = vld [vmem:[#allocation12 + $0x70] sm:$0xff]
          %v1297 = vld [vmem:[#allocation12 + $0x78] sm:$0xff]
          %v1298 = vld [vmem:[%s7] sm:$0x1]
          %v1300 = vlaneseq
          %v1301 = vshrl.u32 %v1300, 7
          %v1302 = vsub.s32 0, %v1301
          %v1303 = vrot.slane %v1298, %v1302
          %1305 = vmatprep.subr.mxu0 0.0
          %1306 = vmatpush1.msra.mxu0 %v1282
          %1307 = vmatprep.subr.mxu0 0.0
          %1308 = vmatpush1.msra.mxu0 %v1283
          %1309 = vmatprep.subr.mxu0 0.0
          %1310 = vmatpush1.msra.mxu0 %v1284
          %1311 = vmatprep.subr.mxu0 0.0
          %1312 = vmatpush1.msra.mxu0 %v1285
          %1313 = vmatprep.subr.mxu0 0.0
          %1314 = vmatpush1.msra.mxu0 %v1286
          %1315 = vmatprep.subr.mxu0 0.0
          %1316 = vmatpush1.msra.mxu0 %v1287
          %1317 = vmatprep.subr.mxu0 0.0
          %1318 = vmatpush1.msra.mxu0 %v1288
          %1319 = vmatprep.subr.mxu0 0.0
          %1320 = vmatpush1.msra.mxu0 %v1289
          %1321 = vmatprep.subr.mxu0 0.0
          %1322 = vmatpush1.msra.mxu0 %v1290
          %1323 = vmatprep.subr.mxu0 0.0
          %1324 = vmatpush1.msra.mxu0 %v1291
          %1325 = vmatprep.subr.mxu0 0.0
          %1326 = vmatpush1.msra.mxu0 %v1292
          %1327 = vmatprep.subr.mxu0 0.0
          %1328 = vmatpush1.msra.mxu0 %v1293
          %1329 = vmatprep.subr.mxu0 0.0
          %1330 = vmatpush1.msra.mxu0 %v1294
          %1331 = vmatprep.subr.mxu0 0.0
          %1332 = vmatpush1.msra.mxu0 %v1295
          %1333 = vmatprep.subr.mxu0 0.0
          %1334 = vmatpush1.msra.mxu0 %v1296
          %1335 = vmatprep.subr.mxu0 0.0
          %1336 = vmatpush1.msra.mxu0 %v1297
          %1337 = vmatprep.subr.mxu0 0.0
          %1338 = vmatpush1.msra.mxu0 0.0
          %1339 = vmatprep.subr.mxu0 0.0
          %1340 = vmatpush1.msra.mxu0 0.0
          %1341 = vmatprep.subr.mxu0 0.0
          %1342 = vmatpush1.msra.mxu0 0.0
          %1343 = vmatprep.subr.mxu0 0.0
          %1344 = vmatpush1.msra.mxu0 0.0
          %1345 = vmatprep.subr.mxu0 0.0
          %1346 = vmatpush1.msra.mxu0 0.0
          %1347 = vmatprep.subr.mxu0 0.0
          %1348 = vmatpush1.msra.mxu0 0.0
          %1349 = vmatprep.subr.mxu0 0.0
          %1350 = vmatpush1.msra.mxu0 0.0
          %1351 = vmatprep.subr.mxu0 0.0
          %1352 = vmatpush1.msra.mxu0 0.0
          %1353 = vmatprep.subr.mxu0 0.0
          %1354 = vmatpush1.msra.mxu0 0.0
          %1355 = vmatprep.subr.mxu0 0.0
          %1356 = vmatpush1.msra.mxu0 0.0
          %1357 = vmatprep.subr.mxu0 0.0
          %1358 = vmatpush1.msra.mxu0 0.0
          %1359 = vmatprep.subr.mxu0 0.0
          %1360 = vmatpush1.msra.mxu0 0.0
          %1361 = vmatprep.subr.mxu0 0.0
          %1362 = vmatpush1.msra.mxu0 0.0
          %1363 = vmatprep.subr.mxu0 0.0
          %1364 = vmatpush1.msra.mxu0 0.0
          %1365 = vmatprep.subr.mxu0 0.0
          %1366 = vmatpush1.msra.mxu0 0.0
          %1367 = vmatprep.subr.mxu0 0.0
          %1368 = vmatpush1.msra.mxu0 0.0
          %1369 = vmatprep.mubr.f32.mxu0 0.0
          %1370 = vmatmul.mubr.f32.gmra.mrb[0].mxu0 %v1281
          %v1371 = vpop.f32.mrb[0].mxu0
          %v1372 = vadd.f32 %v1303, %v1371
          %v1373 = vpop.f32.mrb[0].mxu0
          %1374 = vdwg.mxu0
          %vm1375 = vcmp.gt.f32.partialorder %v1372, 0.0
          %v1376 = vmin.f32 %v1372, 0.0
          %v1377 = vmul.f32 %v1376, 1.442695
          %v1378 = vpow.pop %v1377
          %v1379 = vsub.f32 %v1378, 1.0
          %v1380 = vsel %vm1375, %v1372, %v1379
          %1381 = vst [vmem:[#allocation13] sm:$0xff] %v1380
        $region80: #{tpu_custom_call.1} parent=51 // pred_fallthru
          _
        // Predicated region
        $region81: #{tpu_custom_call.1} parent=51 // pred_check
          %p1382 = pneg %p211
        $region82: #{tpu_custom_call.1} parent=51 // pred_check_branch
          %1384 = sbr.rel (%p1382) target = $region84
        $region83: #{tpu_custom_call.1} parent=51 // pred_region
          %s1386 = ssub.s32 128, 128
          %1387 = vsyncadd [#allocation6], %s1386
          %s1389 = sshll.u32 [#allocation13], 4
          %s1390 = int_to_ptr.vmem [resolvable:$true] %s1389
          %1392 = dma.vmem_to_hbm [thread:$0]  %s1390, 128, %s8, [#allocation6]
        $region84: #{tpu_custom_call.1} parent=51 // pred_fallthru
          _
        // Predicated region
        $region85: #{tpu_custom_call.1} parent=51 // pred_check
          %p1393 = pneg %p211
        $region86: #{tpu_custom_call.1} parent=51 // pred_check_branch
          %1395 = sbr.rel (%p1393) target = $region88
        $region87: #{tpu_custom_call.1} parent=51 // pred_region
          %1396 = dma.done [#allocation6], 128
        $region88: #{tpu_custom_call.1} parent=51 // pred_fallthru
          _
      $region52: #{tpu_custom_call.1} parent=5 // pred_fallthru
        _
      %p1397 = scmp.le.s32.totalorder 2, %s20
      // Predicated region
      $region89: #{tpu_custom_call.1} parent=5 // pred_check
        %p1398 = pneg %p1397
      $region90: #{tpu_custom_call.1} parent=5 // pred_check_branch
        %1400 = sbr.rel (%p1398) target = $region92
      $region91: #{tpu_custom_call.1} parent=5 // pred_region
        %s1401 = ssub.s32 %s20, 2
      $region92: #{tpu_custom_call.1} parent=5 // pred_fallthru
        _
    $region6: #{tpu_custom_call.1} parent=1 // loop_footer
      %s24 = sadd.s32 1, %s20
    $region7: #{tpu_custom_call.1} parent=1 // loop_footer_branch
      %19 = sbr.rel target = $region3
    $region8: #{tpu_custom_call.1} parent=1 // loop_exit
      _
    %1402 = vsyncpa [#allocation5], 1
    %s1403 = scalar_lea.sflag [#allocation5], 1
    %1404 = vsyncpa %s1403, 1
    %1405 = vsyncpa [#allocation8], 1
    %1406 = vsyncpa [#allocation11], 1
    %1407 = vsyncpa [#allocation6], 1
    %s1408 = scalar_lea.sflag [#allocation6], 1
    %1409 = vsyncpa %s1408, 1

</llo_original>
